<compile_context>
chip_gen: v5e
topology: v5e:2x2
jax: 0.10.0
libtpu: 0.0.40
codegen_flags: <defaults>
</compile_context>

<pallas_src>
import functools

import jax
import jax.numpy as jnp
import numpy as np
from jax.experimental import pallas as pl
from jax.experimental.pallas import tpu as pltpu

_LANE = 128
_TB = 8          # samples per batch tile -> dense (8, 128) output block


# ----------------------------------------------------------------------------
# Pallas kernel: whole encoder forward for one batch tile of TB samples.
# Activation layout everywhere: rows = (n, h) [sublanes], cols padded to 128
# lanes with layout (w, c) -> col = w*C + c.
# ----------------------------------------------------------------------------
def _encoder_kernel(x0_ref, l1_ref, r1_ref, b1_ref,
                    l2_ref, r2_ref, s2_ref,
                    l3_ref, r3_ref, b3_ref,
                    p_ref, v1_ref, lb1_ref, w2_ref, lb2_ref,
                    out_ref):
    def stage(x, l_ref, r_ref, bias_ref):
        # x: bf16 (rows, 128).  Three vertical-tap row selections (exact 0/1
        # matmuls, f32 acc), lane-aligned concat, then ONE fused weight matmul
        # with K = 3*128 = 384; bias + ReLU in f32; next-stage input in bf16.
        taps = [jnp.dot(l_ref[i], x, preferred_element_type=jnp.float32)
                for i in range(3)]
        t = jnp.concatenate(taps, axis=-1).astype(jnp.bfloat16)   # exact values
        y = jnp.dot(t, r_ref[...], preferred_element_type=jnp.float32)
        y = jnp.maximum(y + bias_ref[...], 0.0)
        return y.astype(jnp.bfloat16)

    y = stage(x0_ref[...], l1_ref, r1_ref, b1_ref)   # conv1 + ReLU        (112,128)
    y = stage(y, l2_ref, r2_ref, s2_ref)             # conv2 + BN + ReLU   ( 56,128)
    y = stage(y, l3_ref, r3_ref, b3_ref)             # conv3 + ReLU        ( 24,128)
    y = stage(y, p_ref, v1_ref, lb1_ref)             # flatten + lin1+ReLU (  8, 32)
    out_ref[...] = (jnp.dot(y, w2_ref[...], preferred_element_type=jnp.float32)
                    + lb2_ref[...])                  # lin2: dense (8,128) f32 store


# ----------------------------------------------------------------------------
# One-time, host-side (numpy) constant construction — batch-size independent.
# ----------------------------------------------------------------------------
def _row_select(tb, H, Ho, pad):
    """L[i, n*Ho+ho, n*H+h] = 1 where h = 2*ho + i - pad (vertical tap i)."""
    L = np.zeros((3, tb * Ho, tb * H), np.float32)
    for i in range(3):
        for n in range(tb):
            for ho in range(Ho):
                h = 2 * ho + i - pad
                if 0 <= h < H:
                    L[i, n * Ho + ho, n * H + h] = 1.0
    return L


def _col_weight_cat(wconv, W, Wo, pad, col_scale=None):
    """Stacked horizontal-tap weight: (3*128, 128).
    rows: i*128 + (w*Cin + ci);  cols: wo*Cout + co."""
    Cout, Cin, _, _ = wconv.shape
    S = np.zeros((3, W, Wo), np.float32)
    for j in range(3):
        for wo in range(Wo):
            w = 2 * wo + j - pad
            if 0 <= w < W:
                S[j, w, wo] = 1.0
    R = np.einsum("jwu,ocij->iwcuo", S, wconv)        # (3, W, Cin, Wo, Cout)
    if col_scale is not None:
        R = R * col_scale[None, None, None, None, :]
    R = R.reshape(3, W * Cin, Wo * Cout)
    Rp = np.zeros((3, _LANE, _LANE), np.float32)
    Rp[:, :W * Cin, :Wo * Cout] = R
    return Rp.reshape(3 * _LANE, _LANE)


def _tile_bias(b, Wo):
    t = np.zeros((1, _LANE), np.float32)
    t[0, :Wo * b.shape[0]] = np.tile(b, Wo)           # lane = wo*Cout + co
    return t


def _flatten_select(tb):
    """P[h, n, n*3+h] = 1 : picks conv3 output row h of sample n."""
    P = np.zeros((3, tb, tb * 3), np.float32)
    for h in range(3):
        for n in range(tb):
            P[h, n, n * 3 + h] = 1.0
    return P


def _lin1_weight_cat(lw1):
    """(3*128, 32): row h*128 + wo*32 + co  ->  lw1[co*9 + h*3 + wo, :]
    (PyTorch NCHW flatten order folded in)."""
    V = np.zeros((3, _LANE, lw1.shape[1]), np.float32)
    for h in range(3):
        idx = np.array([co * 9 + h * 3 + wo for wo in range(3) for co in range(32)])
        V[h, :96, :] = lw1[idx, :]
    return V.reshape(3 * _LANE, lw1.shape[1])


def prepare_constants(params):
    """Call ONCE per parameter set (hoisted out of the jitted hot path)."""
    p = {k: np.asarray(v, np.float32) for k, v in params.items()}
    eps = 1e-5

    # conv1: 1 -> 8, stride 2, pad 1, 28 -> 14
    l1 = _row_select(_TB, 28, 14, 1)
    r1 = _col_weight_cat(p["w1"], 28, 14, 1)
    b1 = _tile_bias(p["b1"], 14)

    # conv2: 8 -> 16, stride 2, pad 1, 14 -> 7  (eval-mode BN folded in)
    sc = p["bn_gamma"] / np.sqrt(p["bn_var"] + eps)
    sh = p["bn_beta"] + (p["b2"] - p["bn_mean"]) * sc
    l2 = _row_select(_TB, 14, 7, 1)
    r2 = _col_weight_cat(p["w2"], 14, 7, 1, col_scale=sc)
    s2 = _tile_bias(sh, 7)

    # conv3: 16 -> 32, stride 2, pad 0, 7 -> 3
    l3 = _row_select(_TB, 7, 3, 0)
    r3 = _col_weight_cat(p["w3"], 7, 3, 0)
    b3 = _tile_bias(p["b3"], 3)

    # flatten + linear1 / linear2
    pm = _flatten_select(_TB)
    v1 = _lin1_weight_cat(p["lw1"])
    lb1 = p["lb1"].reshape(1, 32)
    d = p["lw2"].shape[1]
    w2 = np.zeros((32, _LANE), np.float32); w2[:, :d] = p["lw2"]
    lb2 = np.zeros((1, _LANE), np.float32); lb2[0, :d] = p["lb2"]

    bf = lambda a: jnp.asarray(a, jnp.bfloat16)       # MXU inputs (0/1 stays exact)
    f32 = lambda a: jnp.asarray(a, jnp.float32)       # biases stay f32
    return (bf(l1), bf(r1), f32(b1),
            bf(l2), bf(r2), f32(s2),
            bf(l3), bf(r3), f32(b3),
            bf(pm), bf(v1), f32(lb1), bf(w2), f32(lb2))


# ----------------------------------------------------------------------------
# Encoder_conv forward: single fused, batch-gridded Pallas kernel.
# ----------------------------------------------------------------------------
def _cost_estimate(n_tiles, const_bytes):
    f = 0
    for mo, kin in ((_TB * 14, _TB * 28), (_TB * 7, _TB * 14),
                    (_TB * 3, _TB * 7), (_TB, _TB * 3)):
        f += 3 * 2 * mo * kin * _LANE                 # tap-selection dots
    for mo, n in ((_TB * 14, _LANE), (_TB * 7, _LANE), (_TB * 3, _LANE), (_TB, 32)):
        f += 2 * mo * (3 * _LANE) * n                 # fused weight dots
    f += 2 * _TB * 32 * _LANE                         # final linear
    x0_bytes = n_tiles * _TB * 28 * _LANE * 2
    out_bytes = n_tiles * _TB * _LANE * 4
    return pl.CostEstimate(flops=f * n_tiles, transcendentals=0,
                           bytes_accessed=const_bytes + x0_bytes + out_bytes)


@functools.partial(jax.jit, static_argnums=(2,))
def encoder_conv_forward(consts, x_nchw, d):
    N = x_nchw.shape[0]
    assert x_nchw.shape[1:] == (1, 28, 28) and d <= _LANE
    n_tiles = (N + _TB - 1) // _TB
    n_pad = n_tiles * _TB

    # rows = (n, h) [sublanes], cols = w padded to 128 lanes.
    x0 = x_nchw[:, 0, :, :].reshape(N * 28, 28).astype(jnp.bfloat16)
    x0 = jnp.pad(x0, ((0, (n_pad - N) * 28), (0, _LANE - 28)))

    const_bytes = sum(int(np.prod(c.shape)) * c.dtype.itemsize for c in consts)
    inv3 = lambda b: (0, 0, 0)
    inv2 = lambda b: (0, 0)
    const_specs = [pl.BlockSpec(c.shape, inv3 if c.ndim == 3 else inv2)
                   for c in consts]

    out = pl.pallas_call(
        _encoder_kernel,
        out_shape=jax.ShapeDtypeStruct((n_pad, _LANE), jnp.float32),
        grid=(n_tiles,),
        in_specs=[pl.BlockSpec((_TB * 28, _LANE), lambda b: (b, 0))] + const_specs,
        out_specs=pl.BlockSpec((_TB, _LANE), lambda b: (b, 0)),
        compiler_params=pltpu.CompilerParams(
            dimension_semantics=("parallel",),
            vmem_limit_bytes=32 * 1024 * 1024),
        cost_estimate=_cost_estimate(n_tiles, const_bytes),
    )(x0, *consts)
    return out[:N, :d]


# ----------------------------------------------------------------------------
# Deterministic parameter init (synthetic; shapes from the module's __init__)
# ----------------------------------------------------------------------------
def init_params(key, encoded_space_dim):
    ks = jax.random.split(key, 10)
    rn = lambda k, shape, s: jax.random.normal(k, shape, jnp.float32) * s
    return {
        "w1": rn(ks[0], (8, 1, 3, 3), 0.30), "b1": rn(ks[1], (8,), 0.10),
        "w2": rn(ks[2], (16, 8, 3, 3), 0.10), "b2": rn(ks[3], (16,), 0.10),
        "bn_gamma": jnp.ones((16,), jnp.float32),
        "bn_beta": jnp.zeros((16,), jnp.float32),
        "bn_mean": jnp.zeros((16,), jnp.float32),
        "bn_var": jnp.ones((16,), jnp.float32),
        "w3": rn(ks[4], (32, 16, 3, 3), 0.08), "b3": rn(ks[5], (32,), 0.10),
        "lw1": rn(ks[6], (288, 32), 0.06), "lb1": rn(ks[7], (32,), 0.10),
        "lw2": rn(ks[8], (32, encoded_space_dim), 0.15),
        "lb2": rn(ks[9], (encoded_space_dim,), 0.10),
    }


# ----------------------------------------------------------------------------
# Pure-JAX f32 reference (same eval-mode semantics) for correctness check
# ----------------------------------------------------------------------------
def reference_forward(params, x_nchw):
    def conv(x, w, b, stride, pad):
        y = jax.lax.conv_general_dilated(
            x, w, window_strides=(stride, stride),
            padding=[(pad, pad), (pad, pad)],
            dimension_numbers=("NCHW", "OIHW", "NCHW"))
        return y + b.reshape(1, -1, 1, 1)

    eps = 1e-5
    x = jax.nn.relu(conv(x_nchw, params["w1"], params["b1"], 2, 1))
    x = conv(x, params["w2"], params["b2"], 2, 1)
    sc = params["bn_gamma"] / jnp.sqrt(params["bn_var"] + eps)
    sh = params["bn_beta"] - params["bn_mean"] * sc
    x = jax.nn.relu(x * sc.reshape(1, -1, 1, 1) + sh.reshape(1, -1, 1, 1))
    x = jax.nn.relu(conv(x, params["w3"], params["b3"], 2, 0))
    x = x.reshape(x.shape[0], -1)
    x = jax.nn.relu(x @ params["lw1"] + params["lb1"])
    return x @ params["lw2"] + params["lb2"]


if __name__ == "__main__":
    key = jax.random.PRNGKey(0)
    kx, kp = jax.random.split(key)
    encoded_space_dim = 8

    # Input must be (N, 1, 28, 28): Linear(288) implies 32*3*3 after the three convs.
    x = jax.random.normal(kx, (2, 1, 28, 28), jnp.float32)
    params = init_params(kp, encoded_space_dim)

    consts = prepare_constants(params)          # one-time, batch-size independent
    out = jax.block_until_ready(
        encoder_conv_forward(consts, x, encoded_space_dim))
    assert out.shape == (2, encoded_space_dim) and out.dtype == jnp.float32

    ref = reference_forward(params, x)
    # bf16 MXU inputs with f32 accumulation -> compare at a bf16-level tolerance.
    np.testing.assert_allclose(np.asarray(out), np.asarray(ref), rtol=2e-2, atol=2e-2)

    print("KERNEL_OK")
</pallas_src>

<mosaic_0001>
module attributes {stable_mosaic.version = 11 : i64} {
  func.func @_encoder_kernel(%arg0: i32, %arg1: memref<224x128xbf16, #tpu.memory_space<vmem>>, %arg2: memref<3x112x224xbf16, #tpu.memory_space<vmem>>, %arg3: memref<384x128xbf16, #tpu.memory_space<vmem>>, %arg4: memref<1x128xf32, #tpu.memory_space<vmem>>, %arg5: memref<3x56x112xbf16, #tpu.memory_space<vmem>>, %arg6: memref<384x128xbf16, #tpu.memory_space<vmem>>, %arg7: memref<1x128xf32, #tpu.memory_space<vmem>>, %arg8: memref<3x24x56xbf16, #tpu.memory_space<vmem>>, %arg9: memref<384x128xbf16, #tpu.memory_space<vmem>>, %arg10: memref<1x128xf32, #tpu.memory_space<vmem>>, %arg11: memref<3x8x24xbf16, #tpu.memory_space<vmem>>, %arg12: memref<384x32xbf16, #tpu.memory_space<vmem>>, %arg13: memref<1x32xf32, #tpu.memory_space<vmem>>, %arg14: memref<32x128xbf16, #tpu.memory_space<vmem>>, %arg15: memref<1x128xf32, #tpu.memory_space<vmem>>, %arg16: memref<8x128xf32, #tpu.memory_space<vmem>>) attributes {dimension_semantics = [#tpu.dimension_semantics<parallel>], iteration_bounds = array<i64: 1>, scalar_prefetch = 0 : i64, scratch_operands = 0 : i64, tpu.core_type = #tpu.core_type<tc>, window_params = [{transform_indices = @transform_0, window_bounds = array<i64: 224, 128>}, {pipeline_mode = #tpu.pipeline_mode<synchronous>, transform_indices = @transform_1, window_bounds = array<i64: 3, 112, 224>}, {pipeline_mode = #tpu.pipeline_mode<synchronous>, transform_indices = @transform_2, window_bounds = array<i64: 384, 128>}, {pipeline_mode = #tpu.pipeline_mode<synchronous>, transform_indices = @transform_3, window_bounds = array<i64: 1, 128>}, {pipeline_mode = #tpu.pipeline_mode<synchronous>, transform_indices = @transform_4, window_bounds = array<i64: 3, 56, 112>}, {pipeline_mode = #tpu.pipeline_mode<synchronous>, transform_indices = @transform_5, window_bounds = array<i64: 384, 128>}, {pipeline_mode = #tpu.pipeline_mode<synchronous>, transform_indices = @transform_6, window_bounds = array<i64: 1, 128>}, {pipeline_mode = #tpu.pipeline_mode<synchronous>, transform_indices = @transform_7, window_bounds = array<i64: 3, 24, 56>}, {pipeline_mode = #tpu.pipeline_mode<synchronous>, transform_indices = @transform_8, window_bounds = array<i64: 384, 128>}, {pipeline_mode = #tpu.pipeline_mode<synchronous>, transform_indices = @transform_9, window_bounds = array<i64: 1, 128>}, {pipeline_mode = #tpu.pipeline_mode<synchronous>, transform_indices = @transform_10, window_bounds = array<i64: 3, 8, 24>}, {pipeline_mode = #tpu.pipeline_mode<synchronous>, transform_indices = @transform_11, window_bounds = array<i64: 384, 32>}, {pipeline_mode = #tpu.pipeline_mode<synchronous>, transform_indices = @transform_12, window_bounds = array<i64: 1, 32>}, {pipeline_mode = #tpu.pipeline_mode<synchronous>, transform_indices = @transform_13, window_bounds = array<i64: 32, 128>}, {pipeline_mode = #tpu.pipeline_mode<synchronous>, transform_indices = @transform_14, window_bounds = array<i64: 1, 128>}, {transform_indices = @transform_15, window_bounds = array<i64: 8, 128>}]} {
    %c0 = arith.constant 0 : index
    %c0_0 = arith.constant 0 : index
    %0 = vector.load %arg1[%c0, %c0_0] : memref<224x128xbf16, #tpu.memory_space<vmem>>, vector<224x128xbf16>
    %c0_1 = arith.constant 0 : index
    %c0_2 = arith.constant 0 : index
    %c0_3 = arith.constant 0 : index
    %1 = vector.load %arg2[%c0_1, %c0_2, %c0_3] : memref<3x112x224xbf16, #tpu.memory_space<vmem>>, vector<1x112x224xbf16>
    %2 = vector.shape_cast %1 : vector<1x112x224xbf16> to vector<112x224xbf16>
    %cst = arith.constant dense<0.000000e+00> : vector<112x128xf32>
    %3 = tpu.matmul %2, %0, %cst {dimension_numbers = #tpu.dot_dimension_numbers<[1], [0], [0], [1], [0, 0, 1, 1], [], []>} : vector<112x224xbf16>, vector<224x128xbf16>, vector<112x128xf32> -> vector<112x128xf32>
    %c1 = arith.constant 1 : index
    %c0_4 = arith.constant 0 : index
    %c0_5 = arith.constant 0 : index
    %4 = vector.load %arg2[%c1, %c0_4, %c0_5] : memref<3x112x224xbf16, #tpu.memory_space<vmem>>, vector<1x112x224xbf16>
    %5 = vector.shape_cast %4 : vector<1x112x224xbf16> to vector<112x224xbf16>
    %cst_6 = arith.constant dense<0.000000e+00> : vector<112x128xf32>
    %6 = tpu.matmul %5, %0, %cst_6 {dimension_numbers = #tpu.dot_dimension_numbers<[1], [0], [0], [1], [0, 0, 1, 1], [], []>} : vector<112x224xbf16>, vector<224x128xbf16>, vector<112x128xf32> -> vector<112x128xf32>
    %c2 = arith.constant 2 : index
    %c0_7 = arith.constant 0 : index
    %c0_8 = arith.constant 0 : index
    %7 = vector.load %arg2[%c2, %c0_7, %c0_8] : memref<3x112x224xbf16, #tpu.memory_space<vmem>>, vector<1x112x224xbf16>
    %8 = vector.shape_cast %7 : vector<1x112x224xbf16> to vector<112x224xbf16>
    %cst_9 = arith.constant dense<0.000000e+00> : vector<112x128xf32>
    %9 = tpu.matmul %8, %0, %cst_9 {dimension_numbers = #tpu.dot_dimension_numbers<[1], [0], [0], [1], [0, 0, 1, 1], [], []>} : vector<112x224xbf16>, vector<224x128xbf16>, vector<112x128xf32> -> vector<112x128xf32>
    %10 = tpu.concatenate %3, %6, %9 in 1 : vector<112x128xf32>, vector<112x128xf32>, vector<112x128xf32> -> vector<112x384xf32>
    %11 = arith.truncf %10 : vector<112x384xf32> to vector<112x384xbf16>
    %c0_10 = arith.constant 0 : index
    %c0_11 = arith.constant 0 : index
    %12 = vector.load %arg3[%c0_10, %c0_11] : memref<384x128xbf16, #tpu.memory_space<vmem>>, vector<384x128xbf16>
    %cst_12 = arith.constant dense<0.000000e+00> : vector<112x128xf32>
    %13 = tpu.matmul %11, %12, %cst_12 {dimension_numbers = #tpu.dot_dimension_numbers<[1], [0], [0], [1], [0, 0, 1, 1], [], []>} : vector<112x384xbf16>, vector<384x128xbf16>, vector<112x128xf32> -> vector<112x128xf32>
    %c0_13 = arith.constant 0 : index
    %c0_14 = arith.constant 0 : index
    %14 = vector.load %arg4[%c0_13, %c0_14] : memref<1x128xf32, #tpu.memory_space<vmem>>, vector<1x128xf32>
    %15 = vector.broadcast %14 : vector<1x128xf32> to vector<112x128xf32>
    %16 = arith.addf %13, %15 : vector<112x128xf32>
    %cst_15 = arith.constant 0.000000e+00 : f32
    %17 = vector.broadcast %cst_15 : f32 to vector<112x128xf32>
    %18 = arith.maximumf %16, %17 : vector<112x128xf32>
    %19 = arith.truncf %18 : vector<112x128xf32> to vector<112x128xbf16>
    %c0_16 = arith.constant 0 : index
    %c0_17 = arith.constant 0 : index
    %c0_18 = arith.constant 0 : index
    %20 = vector.load %arg5[%c0_16, %c0_17, %c0_18] : memref<3x56x112xbf16, #tpu.memory_space<vmem>>, vector<1x56x112xbf16>
    %21 = vector.shape_cast %20 : vector<1x56x112xbf16> to vector<56x112xbf16>
    %cst_19 = arith.constant dense<0.000000e+00> : vector<56x128xf32>
    %22 = tpu.matmul %21, %19, %cst_19 {dimension_numbers = #tpu.dot_dimension_numbers<[1], [0], [0], [1], [0, 0, 1, 1], [], []>} : vector<56x112xbf16>, vector<112x128xbf16>, vector<56x128xf32> -> vector<56x128xf32>
    %c1_20 = arith.constant 1 : index
    %c0_21 = arith.constant 0 : index
    %c0_22 = arith.constant 0 : index
    %23 = vector.load %arg5[%c1_20, %c0_21, %c0_22] : memref<3x56x112xbf16, #tpu.memory_space<vmem>>, vector<1x56x112xbf16>
    %24 = vector.shape_cast %23 : vector<1x56x112xbf16> to vector<56x112xbf16>
    %cst_23 = arith.constant dense<0.000000e+00> : vector<56x128xf32>
    %25 = tpu.matmul %24, %19, %cst_23 {dimension_numbers = #tpu.dot_dimension_numbers<[1], [0], [0], [1], [0, 0, 1, 1], [], []>} : vector<56x112xbf16>, vector<112x128xbf16>, vector<56x128xf32> -> vector<56x128xf32>
    %c2_24 = arith.constant 2 : index
    %c0_25 = arith.constant 0 : index
    %c0_26 = arith.constant 0 : index
    %26 = vector.load %arg5[%c2_24, %c0_25, %c0_26] : memref<3x56x112xbf16, #tpu.memory_space<vmem>>, vector<1x56x112xbf16>
    %27 = vector.shape_cast %26 : vector<1x56x112xbf16> to vector<56x112xbf16>
    %cst_27 = arith.constant dense<0.000000e+00> : vector<56x128xf32>
    %28 = tpu.matmul %27, %19, %cst_27 {dimension_numbers = #tpu.dot_dimension_numbers<[1], [0], [0], [1], [0, 0, 1, 1], [], []>} : vector<56x112xbf16>, vector<112x128xbf16>, vector<56x128xf32> -> vector<56x128xf32>
    %29 = tpu.concatenate %22, %25, %28 in 1 : vector<56x128xf32>, vector<56x128xf32>, vector<56x128xf32> -> vector<56x384xf32>
    %30 = arith.truncf %29 : vector<56x384xf32> to vector<56x384xbf16>
    %c0_28 = arith.constant 0 : index
    %c0_29 = arith.constant 0 : index
    %31 = vector.load %arg6[%c0_28, %c0_29] : memref<384x128xbf16, #tpu.memory_space<vmem>>, vector<384x128xbf16>
    %cst_30 = arith.constant dense<0.000000e+00> : vector<56x128xf32>
    %32 = tpu.matmul %30, %31, %cst_30 {dimension_numbers = #tpu.dot_dimension_numbers<[1], [0], [0], [1], [0, 0, 1, 1], [], []>} : vector<56x384xbf16>, vector<384x128xbf16>, vector<56x128xf32> -> vector<56x128xf32>
    %c0_31 = arith.constant 0 : index
    %c0_32 = arith.constant 0 : index
    %33 = vector.load %arg7[%c0_31, %c0_32] : memref<1x128xf32, #tpu.memory_space<vmem>>, vector<1x128xf32>
    %34 = vector.broadcast %33 : vector<1x128xf32> to vector<56x128xf32>
    %35 = arith.addf %32, %34 : vector<56x128xf32>
    %cst_33 = arith.constant 0.000000e+00 : f32
    %36 = vector.broadcast %cst_33 : f32 to vector<56x128xf32>
    %37 = arith.maximumf %35, %36 : vector<56x128xf32>
    %38 = arith.truncf %37 : vector<56x128xf32> to vector<56x128xbf16>
    %c0_34 = arith.constant 0 : index
    %c0_35 = arith.constant 0 : index
    %c0_36 = arith.constant 0 : index
    %39 = vector.load %arg8[%c0_34, %c0_35, %c0_36] : memref<3x24x56xbf16, #tpu.memory_space<vmem>>, vector<1x24x56xbf16>
    %40 = vector.shape_cast %39 : vector<1x24x56xbf16> to vector<24x56xbf16>
    %cst_37 = arith.constant dense<0.000000e+00> : vector<24x128xf32>
    %41 = tpu.matmul %40, %38, %cst_37 {dimension_numbers = #tpu.dot_dimension_numbers<[1], [0], [0], [1], [0, 0, 1, 1], [], []>} : vector<24x56xbf16>, vector<56x128xbf16>, vector<24x128xf32> -> vector<24x128xf32>
    %c1_38 = arith.constant 1 : index
    %c0_39 = arith.constant 0 : index
    %c0_40 = arith.constant 0 : index
    %42 = vector.load %arg8[%c1_38, %c0_39, %c0_40] : memref<3x24x56xbf16, #tpu.memory_space<vmem>>, vector<1x24x56xbf16>
    %43 = vector.shape_cast %42 : vector<1x24x56xbf16> to vector<24x56xbf16>
    %cst_41 = arith.constant dense<0.000000e+00> : vector<24x128xf32>
    %44 = tpu.matmul %43, %38, %cst_41 {dimension_numbers = #tpu.dot_dimension_numbers<[1], [0], [0], [1], [0, 0, 1, 1], [], []>} : vector<24x56xbf16>, vector<56x128xbf16>, vector<24x128xf32> -> vector<24x128xf32>
    %c2_42 = arith.constant 2 : index
    %c0_43 = arith.constant 0 : index
    %c0_44 = arith.constant 0 : index
    %45 = vector.load %arg8[%c2_42, %c0_43, %c0_44] : memref<3x24x56xbf16, #tpu.memory_space<vmem>>, vector<1x24x56xbf16>
    %46 = vector.shape_cast %45 : vector<1x24x56xbf16> to vector<24x56xbf16>
    %cst_45 = arith.constant dense<0.000000e+00> : vector<24x128xf32>
    %47 = tpu.matmul %46, %38, %cst_45 {dimension_numbers = #tpu.dot_dimension_numbers<[1], [0], [0], [1], [0, 0, 1, 1], [], []>} : vector<24x56xbf16>, vector<56x128xbf16>, vector<24x128xf32> -> vector<24x128xf32>
    %48 = tpu.concatenate %41, %44, %47 in 1 : vector<24x128xf32>, vector<24x128xf32>, vector<24x128xf32> -> vector<24x384xf32>
    %49 = arith.truncf %48 : vector<24x384xf32> to vector<24x384xbf16>
    %c0_46 = arith.constant 0 : index
    %c0_47 = arith.constant 0 : index
    %50 = vector.load %arg9[%c0_46, %c0_47] : memref<384x128xbf16, #tpu.memory_space<vmem>>, vector<384x128xbf16>
    %cst_48 = arith.constant dense<0.000000e+00> : vector<24x128xf32>
    %51 = tpu.matmul %49, %50, %cst_48 {dimension_numbers = #tpu.dot_dimension_numbers<[1], [0], [0], [1], [0, 0, 1, 1], [], []>} : vector<24x384xbf16>, vector<384x128xbf16>, vector<24x128xf32> -> vector<24x128xf32>
    %c0_49 = arith.constant 0 : index
    %c0_50 = arith.constant 0 : index
    %52 = vector.load %arg10[%c0_49, %c0_50] : memref<1x128xf32, #tpu.memory_space<vmem>>, vector<1x128xf32>
    %53 = vector.broadcast %52 : vector<1x128xf32> to vector<24x128xf32>
    %54 = arith.addf %51, %53 : vector<24x128xf32>
    %cst_51 = arith.constant 0.000000e+00 : f32
    %55 = vector.broadcast %cst_51 : f32 to vector<24x128xf32>
    %56 = arith.maximumf %54, %55 : vector<24x128xf32>
    %57 = arith.truncf %56 : vector<24x128xf32> to vector<24x128xbf16>
    %c0_52 = arith.constant 0 : index
    %c0_53 = arith.constant 0 : index
    %c0_54 = arith.constant 0 : index
    %58 = vector.load %arg11[%c0_52, %c0_53, %c0_54] : memref<3x8x24xbf16, #tpu.memory_space<vmem>>, vector<1x8x24xbf16>
    %59 = vector.shape_cast %58 : vector<1x8x24xbf16> to vector<8x24xbf16>
    %cst_55 = arith.constant dense<0.000000e+00> : vector<8x128xf32>
    %60 = tpu.matmul %59, %57, %cst_55 {dimension_numbers = #tpu.dot_dimension_numbers<[1], [0], [0], [1], [0, 0, 1, 1], [], []>} : vector<8x24xbf16>, vector<24x128xbf16>, vector<8x128xf32> -> vector<8x128xf32>
    %c1_56 = arith.constant 1 : index
    %c0_57 = arith.constant 0 : index
    %c0_58 = arith.constant 0 : index
    %61 = vector.load %arg11[%c1_56, %c0_57, %c0_58] : memref<3x8x24xbf16, #tpu.memory_space<vmem>>, vector<1x8x24xbf16>
    %62 = vector.shape_cast %61 : vector<1x8x24xbf16> to vector<8x24xbf16>
    %cst_59 = arith.constant dense<0.000000e+00> : vector<8x128xf32>
    %63 = tpu.matmul %62, %57, %cst_59 {dimension_numbers = #tpu.dot_dimension_numbers<[1], [0], [0], [1], [0, 0, 1, 1], [], []>} : vector<8x24xbf16>, vector<24x128xbf16>, vector<8x128xf32> -> vector<8x128xf32>
    %c2_60 = arith.constant 2 : index
    %c0_61 = arith.constant 0 : index
    %c0_62 = arith.constant 0 : index
    %64 = vector.load %arg11[%c2_60, %c0_61, %c0_62] : memref<3x8x24xbf16, #tpu.memory_space<vmem>>, vector<1x8x24xbf16>
    %65 = vector.shape_cast %64 : vector<1x8x24xbf16> to vector<8x24xbf16>
    %cst_63 = arith.constant dense<0.000000e+00> : vector<8x128xf32>
    %66 = tpu.matmul %65, %57, %cst_63 {dimension_numbers = #tpu.dot_dimension_numbers<[1], [0], [0], [1], [0, 0, 1, 1], [], []>} : vector<8x24xbf16>, vector<24x128xbf16>, vector<8x128xf32> -> vector<8x128xf32>
    %67 = tpu.concatenate %60, %63, %66 in 1 : vector<8x128xf32>, vector<8x128xf32>, vector<8x128xf32> -> vector<8x384xf32>
    %68 = arith.truncf %67 : vector<8x384xf32> to vector<8x384xbf16>
    %c0_64 = arith.constant 0 : index
    %c0_65 = arith.constant 0 : index
    %69 = vector.load %arg12[%c0_64, %c0_65] : memref<384x32xbf16, #tpu.memory_space<vmem>>, vector<384x32xbf16>
    %cst_66 = arith.constant dense<0.000000e+00> : vector<8x32xf32>
    %70 = tpu.matmul %68, %69, %cst_66 {dimension_numbers = #tpu.dot_dimension_numbers<[1], [0], [0], [1], [0, 0, 1, 1], [], []>} : vector<8x384xbf16>, vector<384x32xbf16>, vector<8x32xf32> -> vector<8x32xf32>
    %c0_67 = arith.constant 0 : index
    %c0_68 = arith.constant 0 : index
    %71 = vector.load %arg13[%c0_67, %c0_68] : memref<1x32xf32, #tpu.memory_space<vmem>>, vector<1x32xf32>
    %72 = vector.broadcast %71 : vector<1x32xf32> to vector<8x32xf32>
    %73 = arith.addf %70, %72 : vector<8x32xf32>
    %cst_69 = arith.constant 0.000000e+00 : f32
    %74 = vector.broadcast %cst_69 : f32 to vector<8x32xf32>
    %75 = arith.maximumf %73, %74 : vector<8x32xf32>
    %76 = arith.truncf %75 : vector<8x32xf32> to vector<8x32xbf16>
    %c0_70 = arith.constant 0 : index
    %c0_71 = arith.constant 0 : index
    %77 = vector.load %arg14[%c0_70, %c0_71] : memref<32x128xbf16, #tpu.memory_space<vmem>>, vector<32x128xbf16>
    %cst_72 = arith.constant dense<0.000000e+00> : vector<8x128xf32>
    %78 = tpu.matmul %76, %77, %cst_72 {dimension_numbers = #tpu.dot_dimension_numbers<[1], [0], [0], [1], [0, 0, 1, 1], [], []>} : vector<8x32xbf16>, vector<32x128xbf16>, vector<8x128xf32> -> vector<8x128xf32>
    %c0_73 = arith.constant 0 : index
    %c0_74 = arith.constant 0 : index
    %79 = vector.load %arg15[%c0_73, %c0_74] : memref<1x128xf32, #tpu.memory_space<vmem>>, vector<1x128xf32>
    %80 = vector.broadcast %79 : vector<1x128xf32> to vector<8x128xf32>
    %81 = arith.addf %78, %80 : vector<8x128xf32>
    %c0_75 = arith.constant 0 : index
    %c0_76 = arith.constant 0 : index
    %82 = vector.load %arg16[%c0_75, %c0_76] : memref<8x128xf32, #tpu.memory_space<vmem>>, vector<8x128xf32>
    tpu.vector_store %arg16[%c0_75, %c0_76], %81 {strides = array<i32>} : memref<8x128xf32, #tpu.memory_space<vmem>>, vector<8x128xf32>,
    return
  }
  func.func @transform_0(%arg0: i32) -> (i32, i32) {
    %c0_i32 = arith.constant 0 : i32
    %c0_i32_0 = arith.constant 0 : i32
    return %arg0, %c0_i32 : i32, i32
  }
  func.func @transform_1(%arg0: i32) -> (i32, i32, i32) {
    %c0_i32 = arith.constant 0 : i32
    %c0_i32_0 = arith.constant 0 : i32
    %c0_i32_1 = arith.constant 0 : i32
    %c0_i32_2 = arith.constant 0 : i32
    return %c0_i32, %c0_i32_0, %c0_i32_1 : i32, i32, i32
  }
  func.func @transform_2(%arg0: i32) -> (i32, i32) {
    %c0_i32 = arith.constant 0 : i32
    %c0_i32_0 = arith.constant 0 : i32
    %c0_i32_1 = arith.constant 0 : i32
    return %c0_i32, %c0_i32_0 : i32, i32
  }
  func.func @transform_3(%arg0: i32) -> (i32, i32) {
    %c0_i32 = arith.constant 0 : i32
    %c0_i32_0 = arith.constant 0 : i32
    %c0_i32_1 = arith.constant 0 : i32
    return %c0_i32, %c0_i32_0 : i32, i32
  }
  func.func @transform_4(%arg0: i32) -> (i32, i32, i32) {
    %c0_i32 = arith.constant 0 : i32
    %c0_i32_0 = arith.constant 0 : i32
    %c0_i32_1 = arith.constant 0 : i32
    %c0_i32_2 = arith.constant 0 : i32
    return %c0_i32, %c0_i32_0, %c0_i32_1 : i32, i32, i32
  }
  func.func @transform_5(%arg0: i32) -> (i32, i32) {
    %c0_i32 = arith.constant 0 : i32
    %c0_i32_0 = arith.constant 0 : i32
    %c0_i32_1 = arith.constant 0 : i32
    return %c0_i32, %c0_i32_0 : i32, i32
  }
  func.func @transform_6(%arg0: i32) -> (i32, i32) {
    %c0_i32 = arith.constant 0 : i32
    %c0_i32_0 = arith.constant 0 : i32
    %c0_i32_1 = arith.constant 0 : i32
    return %c0_i32, %c0_i32_0 : i32, i32
  }
  func.func @transform_7(%arg0: i32) -> (i32, i32, i32) {
    %c0_i32 = arith.constant 0 : i32
    %c0_i32_0 = arith.constant 0 : i32
    %c0_i32_1 = arith.constant 0 : i32
    %c0_i32_2 = arith.constant 0 : i32
    return %c0_i32, %c0_i32_0, %c0_i32_1 : i32, i32, i32
  }
  func.func @transform_8(%arg0: i32) -> (i32, i32) {
    %c0_i32 = arith.constant 0 : i32
    %c0_i32_0 = arith.constant 0 : i32
    %c0_i32_1 = arith.constant 0 : i32
    return %c0_i32, %c0_i32_0 : i32, i32
  }
  func.func @transform_9(%arg0: i32) -> (i32, i32) {
    %c0_i32 = arith.constant 0 : i32
    %c0_i32_0 = arith.constant 0 : i32
    %c0_i32_1 = arith.constant 0 : i32
    return %c0_i32, %c0_i32_0 : i32, i32
  }
  func.func @transform_10(%arg0: i32) -> (i32, i32, i32) {
    %c0_i32 = arith.constant 0 : i32
    %c0_i32_0 = arith.constant 0 : i32
    %c0_i32_1 = arith.constant 0 : i32
    %c0_i32_2 = arith.constant 0 : i32
    return %c0_i32, %c0_i32_0, %c0_i32_1 : i32, i32, i32
  }
  func.func @transform_11(%arg0: i32) -> (i32, i32) {
    %c0_i32 = arith.constant 0 : i32
    %c0_i32_0 = arith.constant 0 : i32
    %c0_i32_1 = arith.constant 0 : i32
    return %c0_i32, %c0_i32_0 : i32, i32
  }
  func.func @transform_12(%arg0: i32) -> (i32, i32) {
    %c0_i32 = arith.constant 0 : i32
    %c0_i32_0 = arith.constant 0 : i32
    %c0_i32_1 = arith.constant 0 : i32
    return %c0_i32, %c0_i32_0 : i32, i32
  }
  func.func @transform_13(%arg0: i32) -> (i32, i32) {
    %c0_i32 = arith.constant 0 : i32
    %c0_i32_0 = arith.constant 0 : i32
    %c0_i32_1 = arith.constant 0 : i32
    return %c0_i32, %c0_i32_0 : i32, i32
  }
  func.func @transform_14(%arg0: i32) -> (i32, i32) {
    %c0_i32 = arith.constant 0 : i32
    %c0_i32_0 = arith.constant 0 : i32
    %c0_i32_1 = arith.constant 0 : i32
    return %c0_i32, %c0_i32_0 : i32, i32
  }
  func.func @transform_15(%arg0: i32) -> (i32, i32) {
    %c0_i32 = arith.constant 0 : i32
    %c0_i32_0 = arith.constant 0 : i32
    return %arg0, %c0_i32 : i32, i32
  }
}

</mosaic_0001>

<llo_original>
// kernel: encoder_conv_forward.1
$region0: #{encoder_conv_forward.1}
  #allocation0 [shape = 'u32[]', space=smem, size = 0x4, offset = 0x4, fixed_abs, tag = 'smem constant byte address 0x4 - core index']
  #allocation1 [shape = 'u32[72,128]{1,0:T(1,128)}', space=vmem, size = 0x9000, scoped, tag = 'internal scratch']
  %s0 = inlined_call_operand.vmem [shape: bf16[224,128], index: 0, kind: input, shape index: {}]
  %s1 = inlined_call_operand.vmem [shape: bf16[3,112,224], index: 1, kind: input, shape index: {}]
  %s2 = inlined_call_operand.vmem [shape: bf16[384,128], index: 2, kind: input, shape index: {}]
  %s3 = inlined_call_operand.hbm [shape: f32[1,128], index: 3, kind: input, shape index: {}]
  %s4 = inlined_call_operand.hbm [shape: bf16[3,56,112], index: 4, kind: input, shape index: {}]
  %s5 = inlined_call_operand.hbm [shape: bf16[384,128], index: 5, kind: input, shape index: {}]
  %s6 = inlined_call_operand.hbm [shape: f32[1,128], index: 6, kind: input, shape index: {}]
  %s7 = inlined_call_operand.hbm [shape: bf16[3,24,56], index: 7, kind: input, shape index: {}]
  %s8 = inlined_call_operand.hbm [shape: bf16[384,128], index: 8, kind: input, shape index: {}]
  %s9 = inlined_call_operand.vmem [shape: f32[1,128], index: 9, kind: input, shape index: {}]
  %s10 = inlined_call_operand.hbm [shape: bf16[3,8,24], index: 10, kind: input, shape index: {}]
  %s11 = inlined_call_operand.vmem [shape: bf16[384,32], index: 11, kind: input, shape index: {}]
  %s12 = inlined_call_operand.vmem [shape: f32[1,32], index: 12, kind: input, shape index: {}]
  %s13 = inlined_call_operand.hbm [shape: bf16[32,128], index: 13, kind: input, shape index: {}]
  %s14 = inlined_call_operand.vmem [shape: f32[1,128], index: 14, kind: input, shape index: {}]
  %s15 = inlined_call_operand.vmem [shape: f32[8,128], index: 15, kind: output, shape index: {}]
  %s16 = sld [smem:[#allocation0]]
  $region102: #{encoder_conv_forward.1} parent=0
    _
  %s18 = ssub.s32 1, %s16
  %s19 = scalar_select 0, %s18, %s16
  $region1: #{encoder_conv_forward.1} parent=0
    #allocation2 [shape = 'u8[512]{0}', space=vmem, size = 0x400, scoped, tag = 'input window, operand 3, single buffered']
    #allocation3 [shape = 's32[1]{0}', space=sflag, size = 0x4, scoped, tag = 'scoped memory for encoder_conv_forward.1']
    #allocation4 [shape = 'u8[43008]{0}', space=vmem, size = 0xa800, scoped, tag = 'input window, operand 4, single buffered']
    #allocation5 [shape = 's32[1]{0}', space=sflag, size = 0x4, scoped, tag = 'scoped memory for encoder_conv_forward.1']
    #allocation6 [shape = 'u8[98304]{0}', space=vmem, size = 0x18000, scoped, tag = 'input window, operand 5, single buffered']
    #allocation7 [shape = 'u8[512]{0}', space=vmem, size = 0x400, scoped, tag = 'input window, operand 6, single buffered']
    #allocation8 [shape = 's32[1]{0}', space=sflag, size = 0x4, scoped, tag = 'scoped memory for encoder_conv_forward.1']
    #allocation9 [shape = 'u8[18432]{0}', space=vmem, size = 0x4800, scoped, tag = 'input window, operand 7, single buffered']
    #allocation10 [shape = 'u8[98304]{0}', space=vmem, size = 0x18000, scoped, tag = 'input window, operand 8, single buffered']
    #allocation11 [shape = 's32[1]{0}', space=sflag, size = 0x4, scoped, tag = 'scoped memory for encoder_conv_forward.1']
    #allocation12 [shape = 'u8[6144]{0}', space=vmem, size = 0x1800, scoped, tag = 'input window, operand 10, single buffered']
    #allocation13 [shape = 'u8[8192]{0}', space=vmem, size = 0x2000, scoped, tag = 'input window, operand 13, single buffered']
    #allocation14 [shape = 's32[1]{0}', space=sflag, size = 0x4, scoped, tag = 'scoped memory for encoder_conv_forward.1']
    %20 = vsyncpa [#allocation3], 0
    %21 = vsyncpa [#allocation5], 0
    %22 = vsyncpa [#allocation8], 0
    %23 = vsyncpa [#allocation11], 0
    %24 = vsyncpa [#allocation14], 0
    // Predicated region
    $region2: #{encoder_conv_forward.1} parent=1 // pred_check
      _
    $region3: #{encoder_conv_forward.1} parent=1 // pred_check_branch
      %26 = sbr.rel (0) target = $region5
    $region4: #{encoder_conv_forward.1} parent=1 // pred_region
      _
    $region5: #{encoder_conv_forward.1} parent=1 // pred_fallthru
      _
    // Predicated region
    $region6: #{encoder_conv_forward.1} parent=1 // pred_check
      _
    $region7: #{encoder_conv_forward.1} parent=1 // pred_check_branch
      %28 = sbr.rel (0) target = $region9
    $region8: #{encoder_conv_forward.1} parent=1 // pred_region
      _
    $region9: #{encoder_conv_forward.1} parent=1 // pred_fallthru
      _
    // Predicated region
    $region10: #{encoder_conv_forward.1} parent=1 // pred_check
      _
    $region11: #{encoder_conv_forward.1} parent=1 // pred_check_branch
      %30 = sbr.rel (0) target = $region13
    $region12: #{encoder_conv_forward.1} parent=1 // pred_region
      _
    $region13: #{encoder_conv_forward.1} parent=1 // pred_fallthru
      _
    // Predicated region
    $region14: #{encoder_conv_forward.1} parent=1 // pred_check
      _
    $region15: #{encoder_conv_forward.1} parent=1 // pred_check_branch
      %32 = sbr.rel (0) target = $region17
    $region16: #{encoder_conv_forward.1} parent=1 // pred_region
      %34 = vsyncadd [#allocation3], 0
      %s36 = sshll.u32 %s3, 4
      %s37 = int_to_ptr.hbm [resolvable:$true] %s36
      %s38 = sshll.u32 [#allocation2], 4
      %s39 = int_to_ptr.vmem [resolvable:$true] %s38
      %41 = dma.hbm_to_vmem [thread:$0]  %s37, 16, %s39, [#allocation3]
    $region17: #{encoder_conv_forward.1} parent=1 // pred_fallthru
      _
    // Predicated region
    $region18: #{encoder_conv_forward.1} parent=1 // pred_check
      _
    $region19: #{encoder_conv_forward.1} parent=1 // pred_check_branch
      %43 = sbr.rel (0) target = $region21
    $region20: #{encoder_conv_forward.1} parent=1 // pred_region
      %45 = vsyncadd [#allocation5], 0
      %s46 = sshll.u32 %s4, 4
      %s47 = int_to_ptr.hbm [resolvable:$true] %s46
      %s48 = sshll.u32 [#allocation4], 4
      %s49 = int_to_ptr.vmem [resolvable:$true] %s48
      %54 = dma.hbm_to_vmem [thread:$0]  %s47, 1344, %s49, [#allocation5], 64, 64, 4
    $region21: #{encoder_conv_forward.1} parent=1 // pred_fallthru
      _
    // Predicated region
    $region22: #{encoder_conv_forward.1} parent=1 // pred_check
      _
    $region23: #{encoder_conv_forward.1} parent=1 // pred_check_branch
      %56 = sbr.rel (0) target = $region25
    $region24: #{encoder_conv_forward.1} parent=1 // pred_region
      %58 = vsyncadd [#allocation5], 0
      %s59 = sshll.u32 %s5, 4
      %s60 = int_to_ptr.hbm [resolvable:$true] %s59
      %s61 = sshll.u32 [#allocation6], 4
      %s62 = int_to_ptr.vmem [resolvable:$true] %s61
      %67 = dma.hbm_to_vmem [thread:$0]  %s60, 3072, %s62, [#allocation5], 64, 64, 4
    $region25: #{encoder_conv_forward.1} parent=1 // pred_fallthru
      _
    // Predicated region
    $region26: #{encoder_conv_forward.1} parent=1 // pred_check
      _
    $region27: #{encoder_conv_forward.1} parent=1 // pred_check_branch
      %69 = sbr.rel (0) target = $region29
    $region28: #{encoder_conv_forward.1} parent=1 // pred_region
      %71 = vsyncadd [#allocation8], 0
      %s73 = sshll.u32 %s6, 4
      %s74 = int_to_ptr.hbm [resolvable:$true] %s73
      %s75 = sshll.u32 [#allocation7], 4
      %s76 = int_to_ptr.vmem [resolvable:$true] %s75
      %78 = dma.hbm_to_vmem [thread:$0]  %s74, 16, %s76, [#allocation8]
    $region29: #{encoder_conv_forward.1} parent=1 // pred_fallthru
      _
    // Predicated region
    $region30: #{encoder_conv_forward.1} parent=1 // pred_check
      _
    $region31: #{encoder_conv_forward.1} parent=1 // pred_check_branch
      %80 = sbr.rel (0) target = $region33
    $region32: #{encoder_conv_forward.1} parent=1 // pred_region
      %82 = vsyncadd [#allocation8], 0
      %s83 = sshll.u32 %s7, 4
      %s84 = int_to_ptr.hbm [resolvable:$true] %s83
      %s85 = sshll.u32 [#allocation9], 4
      %s86 = int_to_ptr.vmem [resolvable:$true] %s85
      %91 = dma.hbm_to_vmem [thread:$0]  %s84, 576, %s86, [#allocation8], 64, 64, 4
    $region33: #{encoder_conv_forward.1} parent=1 // pred_fallthru
      _
    // Predicated region
    $region34: #{encoder_conv_forward.1} parent=1 // pred_check
      _
    $region35: #{encoder_conv_forward.1} parent=1 // pred_check_branch
      %93 = sbr.rel (0) target = $region37
    $region36: #{encoder_conv_forward.1} parent=1 // pred_region
      %95 = vsyncadd [#allocation11], 0
      %s96 = sshll.u32 %s8, 4
      %s97 = int_to_ptr.hbm [resolvable:$true] %s96
      %s98 = sshll.u32 [#allocation10], 4
      %s99 = int_to_ptr.vmem [resolvable:$true] %s98
      %104 = dma.hbm_to_vmem [thread:$0]  %s97, 3072, %s99, [#allocation11], 64, 64, 4
    $region37: #{encoder_conv_forward.1} parent=1 // pred_fallthru
      _
    // Predicated region
    $region38: #{encoder_conv_forward.1} parent=1 // pred_check
      _
    $region39: #{encoder_conv_forward.1} parent=1 // pred_check_branch
      %106 = sbr.rel (0) target = $region41
    $region40: #{encoder_conv_forward.1} parent=1 // pred_region
      _
    $region41: #{encoder_conv_forward.1} parent=1 // pred_fallthru
      _
    // Predicated region
    $region42: #{encoder_conv_forward.1} parent=1 // pred_check
      _
    $region43: #{encoder_conv_forward.1} parent=1 // pred_check_branch
      %108 = sbr.rel (0) target = $region45
    $region44: #{encoder_conv_forward.1} parent=1 // pred_region
      %110 = vsyncadd [#allocation11], 0
      %s111 = sshll.u32 %s10, 4
      %s112 = int_to_ptr.hbm [resolvable:$true] %s111
      %s113 = sshll.u32 [#allocation12], 4
      %s114 = int_to_ptr.vmem [resolvable:$true] %s113
      %119 = dma.hbm_to_vmem [thread:$0]  %s112, 192, %s114, [#allocation11], 64, 64, 4
    $region45: #{encoder_conv_forward.1} parent=1 // pred_fallthru
      _
    // Predicated region
    $region46: #{encoder_conv_forward.1} parent=1 // pred_check
      _
    $region47: #{encoder_conv_forward.1} parent=1 // pred_check_branch
      %121 = sbr.rel (0) target = $region49
    $region48: #{encoder_conv_forward.1} parent=1 // pred_region
      _
    $region49: #{encoder_conv_forward.1} parent=1 // pred_fallthru
      _
    // Predicated region
    $region50: #{encoder_conv_forward.1} parent=1 // pred_check
      _
    $region51: #{encoder_conv_forward.1} parent=1 // pred_check_branch
      %123 = sbr.rel (0) target = $region53
    $region52: #{encoder_conv_forward.1} parent=1 // pred_region
      _
    $region53: #{encoder_conv_forward.1} parent=1 // pred_fallthru
      _
    // Predicated region
    $region54: #{encoder_conv_forward.1} parent=1 // pred_check
      _
    $region55: #{encoder_conv_forward.1} parent=1 // pred_check_branch
      %125 = sbr.rel (0) target = $region57
    $region56: #{encoder_conv_forward.1} parent=1 // pred_region
      %127 = vsyncadd [#allocation14], 0
      %s128 = sshll.u32 %s13, 4
      %s129 = int_to_ptr.hbm [resolvable:$true] %s128
      %s130 = sshll.u32 [#allocation13], 4
      %s131 = int_to_ptr.vmem [resolvable:$true] %s130
      %136 = dma.hbm_to_vmem [thread:$0]  %s129, 256, %s131, [#allocation14], 64, 64, 4
    $region57: #{encoder_conv_forward.1} parent=1 // pred_fallthru
      _
    // Predicated region
    $region58: #{encoder_conv_forward.1} parent=1 // pred_check
      _
    $region59: #{encoder_conv_forward.1} parent=1 // pred_check_branch
      %138 = sbr.rel (0) target = $region61
    $region60: #{encoder_conv_forward.1} parent=1 // pred_region
      _
    $region61: #{encoder_conv_forward.1} parent=1 // pred_fallthru
      _
    // Predicated region
    $region62: #{encoder_conv_forward.1} parent=1 // pred_check
      _
    $region63: #{encoder_conv_forward.1} parent=1 // pred_check_branch
      %140 = sbr.rel (0) target = $region65
    $region64: #{encoder_conv_forward.1} parent=1 // pred_region
      %142 = dma.done [#allocation3], 16
    $region65: #{encoder_conv_forward.1} parent=1 // pred_fallthru
      _
    // Predicated region
    $region66: #{encoder_conv_forward.1} parent=1 // pred_check
      _
    $region67: #{encoder_conv_forward.1} parent=1 // pred_check_branch
      %144 = sbr.rel (0) target = $region69
    $region68: #{encoder_conv_forward.1} parent=1 // pred_region
      %146 = dma.done [#allocation5], 1344
    $region69: #{encoder_conv_forward.1} parent=1 // pred_fallthru
      _
    // Predicated region
    $region70: #{encoder_conv_forward.1} parent=1 // pred_check
      _
    $region71: #{encoder_conv_forward.1} parent=1 // pred_check_branch
      %148 = sbr.rel (0) target = $region73
    $region72: #{encoder_conv_forward.1} parent=1 // pred_region
      %150 = dma.done [#allocation5], 3072
    $region73: #{encoder_conv_forward.1} parent=1 // pred_fallthru
      _
    // Predicated region
    $region74: #{encoder_conv_forward.1} parent=1 // pred_check
      _
    $region75: #{encoder_conv_forward.1} parent=1 // pred_check_branch
      %152 = sbr.rel (0) target = $region77
    $region76: #{encoder_conv_forward.1} parent=1 // pred_region
      %154 = dma.done [#allocation8], 16
    $region77: #{encoder_conv_forward.1} parent=1 // pred_fallthru
      _
    // Predicated region
    $region78: #{encoder_conv_forward.1} parent=1 // pred_check
      _
    $region79: #{encoder_conv_forward.1} parent=1 // pred_check_branch
      %156 = sbr.rel (0) target = $region81
    $region80: #{encoder_conv_forward.1} parent=1 // pred_region
      %158 = dma.done [#allocation8], 576
    $region81: #{encoder_conv_forward.1} parent=1 // pred_fallthru
      _
    // Predicated region
    $region82: #{encoder_conv_forward.1} parent=1 // pred_check
      _
    $region83: #{encoder_conv_forward.1} parent=1 // pred_check_branch
      %160 = sbr.rel (0) target = $region85
    $region84: #{encoder_conv_forward.1} parent=1 // pred_region
      %162 = dma.done [#allocation11], 3072
    $region85: #{encoder_conv_forward.1} parent=1 // pred_fallthru
      _
    // Predicated region
    $region86: #{encoder_conv_forward.1} parent=1 // pred_check
      _
    $region87: #{encoder_conv_forward.1} parent=1 // pred_check_branch
      %164 = sbr.rel (0) target = $region89
    $region88: #{encoder_conv_forward.1} parent=1 // pred_region
      %166 = dma.done [#allocation11], 192
    $region89: #{encoder_conv_forward.1} parent=1 // pred_fallthru
      _
    // Predicated region
    $region90: #{encoder_conv_forward.1} parent=1 // pred_check
      _
    $region91: #{encoder_conv_forward.1} parent=1 // pred_check_branch
      %168 = sbr.rel (0) target = $region93
    $region92: #{encoder_conv_forward.1} parent=1 // pred_region
      %170 = dma.done [#allocation14], 256
    $region93: #{encoder_conv_forward.1} parent=1 // pred_fallthru
      _
    %v172 = vld [vmem:[%s0] sm:$0xf]
    %v173 = vld [vmem:[%s0 + $0x4] sm:$0xf]
    %v174 = vld [vmem:[%s0 + $0x8] sm:$0xf]
    %v175 = vld [vmem:[%s0 + $0xc] sm:$0xf]
    %v176 = vld [vmem:[%s0 + $0x10] sm:$0xf]
    %v177 = vld [vmem:[%s0 + $0x14] sm:$0xf]
    %v178 = vld [vmem:[%s0 + $0x18] sm:$0xf]
    %v179 = vld [vmem:[%s0 + $0x1c] sm:$0xf]
    %v180 = vld [vmem:[%s0 + $0x20] sm:$0xf]
    %v181 = vld [vmem:[%s0 + $0x24] sm:$0xf]
    %v182 = vld [vmem:[%s0 + $0x28] sm:$0xf]
    %v183 = vld [vmem:[%s0 + $0x2c] sm:$0xf]
    %v184 = vld [vmem:[%s0 + $0x30] sm:$0xf]
    %v185 = vld [vmem:[%s0 + $0x34] sm:$0xf]
    %v186 = vld [vmem:[%s0 + $0x38] sm:$0xf]
    %v187 = vld [vmem:[%s0 + $0x3c] sm:$0xf]
    %v188 = vld [vmem:[%s0 + $0x40] sm:$0xf]
    %v189 = vld [vmem:[%s0 + $0x44] sm:$0xf]
    %v190 = vld [vmem:[%s0 + $0x48] sm:$0xf]
    %v191 = vld [vmem:[%s0 + $0x4c] sm:$0xf]
    %v192 = vld [vmem:[%s0 + $0x50] sm:$0xf]
    %v193 = vld [vmem:[%s0 + $0x54] sm:$0xf]
    %v194 = vld [vmem:[%s0 + $0x58] sm:$0xf]
    %v195 = vld [vmem:[%s0 + $0x5c] sm:$0xf]
    %v196 = vld [vmem:[%s0 + $0x60] sm:$0xf]
    %v197 = vld [vmem:[%s0 + $0x64] sm:$0xf]
    %v198 = vld [vmem:[%s0 + $0x68] sm:$0xf]
    %v199 = vld [vmem:[%s0 + $0x6c] sm:$0xf]
    %v200 = vld [vmem:[%s1] sm:$0xff]
    %v201 = vld [vmem:[%s1 + $0x8] sm:$0xff]
    %v202 = vld [vmem:[%s1 + $0x10] sm:$0xff]
    %v203 = vld [vmem:[%s1 + $0x18] sm:$0xff]
    %v204 = vld [vmem:[%s1 + $0x20] sm:$0xff]
    %v205 = vld [vmem:[%s1 + $0x28] sm:$0xff]
    %v206 = vld [vmem:[%s1 + $0x30] sm:$0xff]
    %v207 = vld [vmem:[%s1 + $0x38] sm:$0xff]
    %v208 = vld [vmem:[%s1 + $0x40] sm:$0xff]
    %v209 = vld [vmem:[%s1 + $0x48] sm:$0xff]
    %v210 = vld [vmem:[%s1 + $0x50] sm:$0xff]
    %v211 = vld [vmem:[%s1 + $0x58] sm:$0xff]
    %v212 = vld [vmem:[%s1 + $0x60] sm:$0xff]
    %v213 = vld [vmem:[%s1 + $0x68] sm:$0xff]
    %v228 = vunpack.c.l.b16 %v200
    %v229 = vunpack.c.h.b16 %v200
    %v230 = vunpack.c.l.b16 %v201
    %v231 = vunpack.c.h.b16 %v201
    %v232 = vunpack.c.l.b16 %v202
    %v233 = vunpack.c.h.b16 %v202
    %v234 = vunpack.c.l.b16 %v203
    %v235 = vunpack.c.h.b16 %v203
    %v236 = vunpack.c.l.b16 %v204
    %v237 = vunpack.c.h.b16 %v204
    %v238 = vunpack.c.l.b16 %v205
    %v239 = vunpack.c.h.b16 %v205
    %v240 = vunpack.c.l.b16 %v206
    %v241 = vunpack.c.h.b16 %v206
    %v242 = vunpack.c.l.b16 %v207
    %v243 = vunpack.c.h.b16 %v207
    %v244 = vunpack.c.l.b16 %v208
    %v245 = vunpack.c.h.b16 %v208
    %v246 = vunpack.c.l.b16 %v209
    %v247 = vunpack.c.h.b16 %v209
    %v248 = vunpack.c.l.b16 %v210
    %v249 = vunpack.c.h.b16 %v210
    %v250 = vunpack.c.l.b16 %v211
    %v251 = vunpack.c.h.b16 %v211
    %v252 = vunpack.c.l.b16 %v212
    %v253 = vunpack.c.h.b16 %v212
    %v254 = vunpack.c.l.b16 %v213
    %v255 = vunpack.c.h.b16 %v213
    %v256 = vpack.c.b16 %v230, %v228
    %v257 = vpack.c.b16 %v231, %v229
    %v258 = vpack.c.b16 %v234, %v232
    %v259 = vpack.c.b16 %v235, %v233
    %v260 = vpack.c.b16 %v238, %v236
    %v261 = vpack.c.b16 %v239, %v237
    %v262 = vpack.c.b16 %v242, %v240
    %v263 = vpack.c.b16 %v243, %v241
    %v264 = vpack.c.b16 %v246, %v244
    %v265 = vpack.c.b16 %v247, %v245
    %v266 = vpack.c.b16 %v250, %v248
    %v267 = vpack.c.b16 %v251, %v249
    %v268 = vpack.c.b16 %v254, %v252
    %v269 = vpack.c.b16 %v255, %v253
    %v305 = vunpack.c.l.b16 %v172
    %v306 = vunpack.c.l.b16 %v173
    %v307 = vunpack.c.l.b16 %v174
    %v308 = vunpack.c.l.b16 %v175
    %v309 = vunpack.c.l.b16 %v176
    %v310 = vunpack.c.l.b16 %v177
    %v311 = vunpack.c.l.b16 %v178
    %v312 = vunpack.c.l.b16 %v179
    %v313 = vunpack.c.l.b16 %v180
    %v314 = vunpack.c.l.b16 %v181
    %v315 = vunpack.c.l.b16 %v182
    %v316 = vunpack.c.l.b16 %v183
    %v317 = vunpack.c.l.b16 %v184
    %v318 = vunpack.c.l.b16 %v185
    %v319 = vunpack.c.l.b16 %v186
    %v320 = vunpack.c.l.b16 %v187
    %v321 = vunpack.c.l.b16 %v188
    %v322 = vunpack.c.l.b16 %v189
    %v323 = vunpack.c.l.b16 %v190
    %v324 = vunpack.c.l.b16 %v191
    %v325 = vunpack.c.l.b16 %v192
    %v326 = vunpack.c.l.b16 %v193
    %v327 = vunpack.c.l.b16 %v194
    %v328 = vunpack.c.l.b16 %v195
    %v329 = vunpack.c.l.b16 %v196
    %v330 = vunpack.c.l.b16 %v197
    %v331 = vunpack.c.l.b16 %v198
    %v332 = vunpack.c.l.b16 %v199
    %v333 = vpack.c.b16 %v306, %v305
    %v334 = vpack.c.b16 %v308, %v307
    %v335 = vpack.c.b16 %v310, %v309
    %v336 = vpack.c.b16 %v312, %v311
    %v337 = vpack.c.b16 %v314, %v313
    %v338 = vpack.c.b16 %v316, %v315
    %v339 = vpack.c.b16 %v318, %v317
    %v340 = vpack.c.b16 %v320, %v319
    %v341 = vpack.c.b16 %v322, %v321
    %v342 = vpack.c.b16 %v324, %v323
    %v343 = vpack.c.b16 %v326, %v325
    %v344 = vpack.c.b16 %v328, %v327
    %v345 = vpack.c.b16 %v330, %v329
    %v346 = vpack.c.b16 %v332, %v331
    %vm361 = vcmask 785408
    %v363 = vsel %vm361, %v257, 0
    %v366 = vsel %vm361, %v259, 0
    %v369 = vsel %vm361, %v261, 0
    %v372 = vsel %vm361, %v263, 0
    %v375 = vsel %vm361, %v265, 0
    %v378 = vsel %vm361, %v267, 0
    %v381 = vsel %vm361, %v269, 0
    %383 = vmatpush.bf16.msra.mxu0 %v340
    %384 = vmatpush.bf16.msra.mxu0 %v339
    %385 = vmatpush.bf16.msra.mxu0 %v338
    %386 = vmatpush.bf16.msra.mxu0 %v337
    %387 = vmatpush.bf16.msra.mxu0 %v336
    %388 = vmatpush.bf16.msra.mxu0 %v335
    %389 = vmatpush.bf16.msra.mxu0 %v334
    %390 = vmatpush.bf16.msra.mxu0 %v333
    %391 = vmatmul.bf16.gmra.mxu0 %v256
    %v392 = vpop.f32.mrf.mxu0
    %v393 = vadd.f32 0.0, %v392
    %v394 = vpop.f32.mrf.mxu0
    %v395 = vadd.f32 0.0, %v394
    %396 = vmatmul.bf16.gmra.mxu0 %v258
    %v397 = vpop.f32.mrf.mxu0
    %v398 = vadd.f32 0.0, %v397
    %v399 = vpop.f32.mrf.mxu0
    %v400 = vadd.f32 0.0, %v399
    %401 = vmatmul.bf16.gmra.mxu0 %v260
    %v402 = vpop.f32.mrf.mxu0
    %v403 = vadd.f32 0.0, %v402
    %v404 = vpop.f32.mrf.mxu0
    %v405 = vadd.f32 0.0, %v404
    %406 = vmatmul.bf16.gmra.mxu0 %v262
    %v407 = vpop.f32.mrf.mxu0
    %v408 = vadd.f32 0.0, %v407
    %v409 = vpop.f32.mrf.mxu0
    %v410 = vadd.f32 0.0, %v409
    %411 = vmatmul.bf16.gmra.mxu0 %v264
    %v412 = vpop.f32.mrf.mxu0
    %v413 = vadd.f32 0.0, %v412
    %v414 = vpop.f32.mrf.mxu0
    %v415 = vadd.f32 0.0, %v414
    %416 = vmatmul.bf16.gmra.mxu0 %v266
    %v417 = vpop.f32.mrf.mxu0
    %v418 = vadd.f32 0.0, %v417
    %v419 = vpop.f32.mrf.mxu0
    %v420 = vadd.f32 0.0, %v419
    %421 = vmatmul.bf16.gmra.mxu0 %v268
    %v422 = vpop.f32.mrf.mxu0
    %v423 = vadd.f32 0.0, %v422
    %v424 = vpop.f32.mrf.mxu0
    %v425 = vadd.f32 0.0, %v424
    %426 = vdwg.mxu0
    %427 = vmatpush.bf16.msra.mxu0 0
    %428 = vmatpush.bf16.msra.mxu0 0
    %429 = vmatpush.bf16.msra.mxu0 %v346
    %430 = vmatpush.bf16.msra.mxu0 %v345
    %431 = vmatpush.bf16.msra.mxu0 %v344
    %432 = vmatpush.bf16.msra.mxu0 %v343
    %433 = vmatpush.bf16.msra.mxu0 %v342
    %434 = vmatpush.bf16.msra.mxu0 %v341
    %435 = vmatmul.bf16.gmra.mxu0 %v363
    %v436 = vpop.f32.mrf.mxu0
    %v437 = vadd.f32 %v393, %v436
    %v438 = vpop.f32.mrf.mxu0
    %v439 = vadd.f32 %v395, %v438
    %440 = vmatmul.bf16.gmra.mxu0 %v366
    %v441 = vpop.f32.mrf.mxu0
    %v442 = vadd.f32 %v398, %v441
    %v443 = vpop.f32.mrf.mxu0
    %v444 = vadd.f32 %v400, %v443
    %445 = vmatmul.bf16.gmra.mxu0 %v369
    %v446 = vpop.f32.mrf.mxu0
    %v447 = vadd.f32 %v403, %v446
    %v448 = vpop.f32.mrf.mxu0
    %v449 = vadd.f32 %v405, %v448
    %450 = vmatmul.bf16.gmra.mxu0 %v372
    %v451 = vpop.f32.mrf.mxu0
    %v452 = vadd.f32 %v408, %v451
    %v453 = vpop.f32.mrf.mxu0
    %v454 = vadd.f32 %v410, %v453
    %455 = vmatmul.bf16.gmra.mxu0 %v375
    %v456 = vpop.f32.mrf.mxu0
    %v457 = vadd.f32 %v413, %v456
    %v458 = vpop.f32.mrf.mxu0
    %v459 = vadd.f32 %v415, %v458
    %460 = vmatmul.bf16.gmra.mxu0 %v378
    %v461 = vpop.f32.mrf.mxu0
    %v462 = vadd.f32 %v418, %v461
    %v463 = vpop.f32.mrf.mxu0
    %v464 = vadd.f32 %v420, %v463
    %465 = vmatmul.bf16.gmra.mxu0 %v381
    %v466 = vpop.f32.mrf.mxu0
    %v467 = vadd.f32 %v423, %v466
    %v468 = vpop.f32.mrf.mxu0
    %v469 = vadd.f32 %v425, %v468
    %470 = vdwg.mxu0
    %s471 = scalar_lea.vmem %s1, 112
    %v472 = vld [vmem:[%s471] sm:$0xff]
    %v473 = vld [vmem:[%s471 + $0x8] sm:$0xff]
    %v474 = vld [vmem:[%s471 + $0x10] sm:$0xff]
    %v475 = vld [vmem:[%s471 + $0x18] sm:$0xff]
    %v476 = vld [vmem:[%s471 + $0x20] sm:$0xff]
    %v477 = vld [vmem:[%s471 + $0x28] sm:$0xff]
    %v478 = vld [vmem:[%s471 + $0x30] sm:$0xff]
    %v479 = vld [vmem:[%s471 + $0x38] sm:$0xff]
    %v480 = vld [vmem:[%s471 + $0x40] sm:$0xff]
    %v481 = vld [vmem:[%s471 + $0x48] sm:$0xff]
    %v482 = vld [vmem:[%s471 + $0x50] sm:$0xff]
    %v483 = vld [vmem:[%s471 + $0x58] sm:$0xff]
    %v484 = vld [vmem:[%s471 + $0x60] sm:$0xff]
    %v485 = vld [vmem:[%s471 + $0x68] sm:$0xff]
    %v500 = vunpack.c.l.b16 %v472
    %v501 = vunpack.c.h.b16 %v472
    %v502 = vunpack.c.l.b16 %v473
    %v503 = vunpack.c.h.b16 %v473
    %v504 = vunpack.c.l.b16 %v474
    %v505 = vunpack.c.h.b16 %v474
    %v506 = vunpack.c.l.b16 %v475
    %v507 = vunpack.c.h.b16 %v475
    %v508 = vunpack.c.l.b16 %v476
    %v509 = vunpack.c.h.b16 %v476
    %v510 = vunpack.c.l.b16 %v477
    %v511 = vunpack.c.h.b16 %v477
    %v512 = vunpack.c.l.b16 %v478
    %v513 = vunpack.c.h.b16 %v478
    %v514 = vunpack.c.l.b16 %v479
    %v515 = vunpack.c.h.b16 %v479
    %v516 = vunpack.c.l.b16 %v480
    %v517 = vunpack.c.h.b16 %v480
    %v518 = vunpack.c.l.b16 %v481
    %v519 = vunpack.c.h.b16 %v481
    %v520 = vunpack.c.l.b16 %v482
    %v521 = vunpack.c.h.b16 %v482
    %v522 = vunpack.c.l.b16 %v483
    %v523 = vunpack.c.h.b16 %v483
    %v524 = vunpack.c.l.b16 %v484
    %v525 = vunpack.c.h.b16 %v484
    %v526 = vunpack.c.l.b16 %v485
    %v527 = vunpack.c.h.b16 %v485
    %v528 = vpack.c.b16 %v502, %v500
    %v529 = vpack.c.b16 %v503, %v501
    %v530 = vpack.c.b16 %v506, %v504
    %v531 = vpack.c.b16 %v507, %v505
    %v532 = vpack.c.b16 %v510, %v508
    %v533 = vpack.c.b16 %v511, %v509
    %v534 = vpack.c.b16 %v514, %v512
    %v535 = vpack.c.b16 %v515, %v513
    %v536 = vpack.c.b16 %v518, %v516
    %v537 = vpack.c.b16 %v519, %v517
    %v538 = vpack.c.b16 %v522, %v520
    %v539 = vpack.c.b16 %v523, %v521
    %v540 = vpack.c.b16 %v526, %v524
    %v541 = vpack.c.b16 %v527, %v525
    %v550 = vsel %vm361, %v529, 0
    %v553 = vsel %vm361, %v531, 0
    %v556 = vsel %vm361, %v533, 0
    %v559 = vsel %vm361, %v535, 0
    %v562 = vsel %vm361, %v537, 0
    %v565 = vsel %vm361, %v539, 0
    %v568 = vsel %vm361, %v541, 0
    %570 = vmatpush.bf16.msra.mxu0 %v340
    %571 = vmatpush.bf16.msra.mxu0 %v339
    %572 = vmatpush.bf16.msra.mxu0 %v338
    %573 = vmatpush.bf16.msra.mxu0 %v337
    %574 = vmatpush.bf16.msra.mxu0 %v336
    %575 = vmatpush.bf16.msra.mxu0 %v335
    %576 = vmatpush.bf16.msra.mxu0 %v334
    %577 = vmatpush.bf16.msra.mxu0 %v333
    %578 = vmatmul.bf16.gmra.mxu0 %v528
    %v579 = vpop.f32.mrf.mxu0
    %v580 = vadd.f32 0.0, %v579
    %v581 = vpop.f32.mrf.mxu0
    %v582 = vadd.f32 0.0, %v581
    %583 = vmatmul.bf16.gmra.mxu0 %v530
    %v584 = vpop.f32.mrf.mxu0
    %v585 = vadd.f32 0.0, %v584
    %v586 = vpop.f32.mrf.mxu0
    %v587 = vadd.f32 0.0, %v586
    %588 = vmatmul.bf16.gmra.mxu0 %v532
    %v589 = vpop.f32.mrf.mxu0
    %v590 = vadd.f32 0.0, %v589
    %v591 = vpop.f32.mrf.mxu0
    %v592 = vadd.f32 0.0, %v591
    %593 = vmatmul.bf16.gmra.mxu0 %v534
    %v594 = vpop.f32.mrf.mxu0
    %v595 = vadd.f32 0.0, %v594
    %v596 = vpop.f32.mrf.mxu0
    %v597 = vadd.f32 0.0, %v596
    %598 = vmatmul.bf16.gmra.mxu0 %v536
    %v599 = vpop.f32.mrf.mxu0
    %v600 = vadd.f32 0.0, %v599
    %v601 = vpop.f32.mrf.mxu0
    %v602 = vadd.f32 0.0, %v601
    %603 = vmatmul.bf16.gmra.mxu0 %v538
    %v604 = vpop.f32.mrf.mxu0
    %v605 = vadd.f32 0.0, %v604
    %v606 = vpop.f32.mrf.mxu0
    %v607 = vadd.f32 0.0, %v606
    %608 = vmatmul.bf16.gmra.mxu0 %v540
    %v609 = vpop.f32.mrf.mxu0
    %v610 = vadd.f32 0.0, %v609
    %v611 = vpop.f32.mrf.mxu0
    %v612 = vadd.f32 0.0, %v611
    %613 = vdwg.mxu0
    %614 = vmatpush.bf16.msra.mxu0 0
    %615 = vmatpush.bf16.msra.mxu0 0
    %616 = vmatpush.bf16.msra.mxu0 %v346
    %617 = vmatpush.bf16.msra.mxu0 %v345
    %618 = vmatpush.bf16.msra.mxu0 %v344
    %619 = vmatpush.bf16.msra.mxu0 %v343
    %620 = vmatpush.bf16.msra.mxu0 %v342
    %621 = vmatpush.bf16.msra.mxu0 %v341
    %622 = vmatmul.bf16.gmra.mxu0 %v550
    %v623 = vpop.f32.mrf.mxu0
    %v624 = vadd.f32 %v580, %v623
    %v625 = vpop.f32.mrf.mxu0
    %v626 = vadd.f32 %v582, %v625
    %627 = vmatmul.bf16.gmra.mxu0 %v553
    %v628 = vpop.f32.mrf.mxu0
    %v629 = vadd.f32 %v585, %v628
    %v630 = vpop.f32.mrf.mxu0
    %v631 = vadd.f32 %v587, %v630
    %632 = vmatmul.bf16.gmra.mxu0 %v556
    %v633 = vpop.f32.mrf.mxu0
    %v634 = vadd.f32 %v590, %v633
    %v635 = vpop.f32.mrf.mxu0
    %v636 = vadd.f32 %v592, %v635
    %637 = vmatmul.bf16.gmra.mxu0 %v559
    %v638 = vpop.f32.mrf.mxu0
    %v639 = vadd.f32 %v595, %v638
    %v640 = vpop.f32.mrf.mxu0
    %v641 = vadd.f32 %v597, %v640
    %642 = vmatmul.bf16.gmra.mxu0 %v562
    %v643 = vpop.f32.mrf.mxu0
    %v644 = vadd.f32 %v600, %v643
    %v645 = vpop.f32.mrf.mxu0
    %v646 = vadd.f32 %v602, %v645
    %647 = vmatmul.bf16.gmra.mxu0 %v565
    %v648 = vpop.f32.mrf.mxu0
    %v649 = vadd.f32 %v605, %v648
    %v650 = vpop.f32.mrf.mxu0
    %v651 = vadd.f32 %v607, %v650
    %652 = vmatmul.bf16.gmra.mxu0 %v568
    %v653 = vpop.f32.mrf.mxu0
    %v654 = vadd.f32 %v610, %v653
    %v655 = vpop.f32.mrf.mxu0
    %v656 = vadd.f32 %v612, %v655
    %657 = vdwg.mxu0
    %s658 = scalar_lea.vmem %s1, 224
    %v659 = vld [vmem:[%s658] sm:$0xff]
    %v660 = vld [vmem:[%s658 + $0x8] sm:$0xff]
    %v661 = vld [vmem:[%s658 + $0x10] sm:$0xff]
    %v662 = vld [vmem:[%s658 + $0x18] sm:$0xff]
    %v663 = vld [vmem:[%s658 + $0x20] sm:$0xff]
    %v664 = vld [vmem:[%s658 + $0x28] sm:$0xff]
    %v665 = vld [vmem:[%s658 + $0x30] sm:$0xff]
    %v666 = vld [vmem:[%s658 + $0x38] sm:$0xff]
    %v667 = vld [vmem:[%s658 + $0x40] sm:$0xff]
    %v668 = vld [vmem:[%s658 + $0x48] sm:$0xff]
    %v669 = vld [vmem:[%s658 + $0x50] sm:$0xff]
    %v670 = vld [vmem:[%s658 + $0x58] sm:$0xff]
    %v671 = vld [vmem:[%s658 + $0x60] sm:$0xff]
    %v672 = vld [vmem:[%s658 + $0x68] sm:$0xff]
    %v687 = vunpack.c.l.b16 %v659
    %v688 = vunpack.c.h.b16 %v659
    %v689 = vunpack.c.l.b16 %v660
    %v690 = vunpack.c.h.b16 %v660
    %v691 = vunpack.c.l.b16 %v661
    %v692 = vunpack.c.h.b16 %v661
    %v693 = vunpack.c.l.b16 %v662
    %v694 = vunpack.c.h.b16 %v662
    %v695 = vunpack.c.l.b16 %v663
    %v696 = vunpack.c.h.b16 %v663
    %v697 = vunpack.c.l.b16 %v664
    %v698 = vunpack.c.h.b16 %v664
    %v699 = vunpack.c.l.b16 %v665
    %v700 = vunpack.c.h.b16 %v665
    %v701 = vunpack.c.l.b16 %v666
    %v702 = vunpack.c.h.b16 %v666
    %v703 = vunpack.c.l.b16 %v667
    %v704 = vunpack.c.h.b16 %v667
    %v705 = vunpack.c.l.b16 %v668
    %v706 = vunpack.c.h.b16 %v668
    %v707 = vunpack.c.l.b16 %v669
    %v708 = vunpack.c.h.b16 %v669
    %v709 = vunpack.c.l.b16 %v670
    %v710 = vunpack.c.h.b16 %v670
    %v711 = vunpack.c.l.b16 %v671
    %v712 = vunpack.c.h.b16 %v671
    %v713 = vunpack.c.l.b16 %v672
    %v714 = vunpack.c.h.b16 %v672
    %v715 = vpack.c.b16 %v689, %v687
    %v716 = vpack.c.b16 %v690, %v688
    %v717 = vpack.c.b16 %v693, %v691
    %v718 = vpack.c.b16 %v694, %v692
    %v719 = vpack.c.b16 %v697, %v695
    %v720 = vpack.c.b16 %v698, %v696
    %v721 = vpack.c.b16 %v701, %v699
    %v722 = vpack.c.b16 %v702, %v700
    %v723 = vpack.c.b16 %v705, %v703
    %v724 = vpack.c.b16 %v706, %v704
    %v725 = vpack.c.b16 %v709, %v707
    %v726 = vpack.c.b16 %v710, %v708
    %v727 = vpack.c.b16 %v713, %v711
    %v728 = vpack.c.b16 %v714, %v712
    %v737 = vsel %vm361, %v716, 0
    %v740 = vsel %vm361, %v718, 0
    %v743 = vsel %vm361, %v720, 0
    %v746 = vsel %vm361, %v722, 0
    %v749 = vsel %vm361, %v724, 0
    %v752 = vsel %vm361, %v726, 0
    %v755 = vsel %vm361, %v728, 0
    %757 = vmatpush.bf16.msra.mxu0 %v340
    %758 = vmatpush.bf16.msra.mxu0 %v339
    %759 = vmatpush.bf16.msra.mxu0 %v338
    %760 = vmatpush.bf16.msra.mxu0 %v337
    %761 = vmatpush.bf16.msra.mxu0 %v336
    %762 = vmatpush.bf16.msra.mxu0 %v335
    %763 = vmatpush.bf16.msra.mxu0 %v334
    %764 = vmatpush.bf16.msra.mxu0 %v333
    %765 = vmatmul.bf16.gmra.mxu0 %v715
    %v766 = vpop.f32.mrf.mxu0
    %v767 = vadd.f32 0.0, %v766
    %v768 = vpop.f32.mrf.mxu0
    %v769 = vadd.f32 0.0, %v768
    %770 = vmatmul.bf16.gmra.mxu0 %v717
    %v771 = vpop.f32.mrf.mxu0
    %v772 = vadd.f32 0.0, %v771
    %v773 = vpop.f32.mrf.mxu0
    %v774 = vadd.f32 0.0, %v773
    %775 = vmatmul.bf16.gmra.mxu0 %v719
    %v776 = vpop.f32.mrf.mxu0
    %v777 = vadd.f32 0.0, %v776
    %v778 = vpop.f32.mrf.mxu0
    %v779 = vadd.f32 0.0, %v778
    %780 = vmatmul.bf16.gmra.mxu0 %v721
    %v781 = vpop.f32.mrf.mxu0
    %v782 = vadd.f32 0.0, %v781
    %v783 = vpop.f32.mrf.mxu0
    %v784 = vadd.f32 0.0, %v783
    %785 = vmatmul.bf16.gmra.mxu0 %v723
    %v786 = vpop.f32.mrf.mxu0
    %v787 = vadd.f32 0.0, %v786
    %v788 = vpop.f32.mrf.mxu0
    %v789 = vadd.f32 0.0, %v788
    %790 = vmatmul.bf16.gmra.mxu0 %v725
    %v791 = vpop.f32.mrf.mxu0
    %v792 = vadd.f32 0.0, %v791
    %v793 = vpop.f32.mrf.mxu0
    %v794 = vadd.f32 0.0, %v793
    %795 = vmatmul.bf16.gmra.mxu0 %v727
    %v796 = vpop.f32.mrf.mxu0
    %v797 = vadd.f32 0.0, %v796
    %v798 = vpop.f32.mrf.mxu0
    %v799 = vadd.f32 0.0, %v798
    %800 = vdwg.mxu0
    %801 = vmatpush.bf16.msra.mxu0 0
    %802 = vmatpush.bf16.msra.mxu0 0
    %803 = vmatpush.bf16.msra.mxu0 %v346
    %804 = vmatpush.bf16.msra.mxu0 %v345
    %805 = vmatpush.bf16.msra.mxu0 %v344
    %806 = vmatpush.bf16.msra.mxu0 %v343
    %807 = vmatpush.bf16.msra.mxu0 %v342
    %808 = vmatpush.bf16.msra.mxu0 %v341
    %809 = vmatmul.bf16.gmra.mxu0 %v737
    %v810 = vpop.f32.mrf.mxu0
    %v811 = vadd.f32 %v767, %v810
    %v812 = vpop.f32.mrf.mxu0
    %v813 = vadd.f32 %v769, %v812
    %814 = vmatmul.bf16.gmra.mxu0 %v740
    %v815 = vpop.f32.mrf.mxu0
    %v816 = vadd.f32 %v772, %v815
    %v817 = vpop.f32.mrf.mxu0
    %v818 = vadd.f32 %v774, %v817
    %819 = vmatmul.bf16.gmra.mxu0 %v743
    %v820 = vpop.f32.mrf.mxu0
    %v821 = vadd.f32 %v777, %v820
    %v822 = vpop.f32.mrf.mxu0
    %v823 = vadd.f32 %v779, %v822
    %824 = vmatmul.bf16.gmra.mxu0 %v746
    %v825 = vpop.f32.mrf.mxu0
    %v826 = vadd.f32 %v782, %v825
    %v827 = vpop.f32.mrf.mxu0
    %v828 = vadd.f32 %v784, %v827
    %829 = vmatmul.bf16.gmra.mxu0 %v749
    %v830 = vpop.f32.mrf.mxu0
    %v831 = vadd.f32 %v787, %v830
    %v832 = vpop.f32.mrf.mxu0
    %v833 = vadd.f32 %v789, %v832
    %834 = vmatmul.bf16.gmra.mxu0 %v752
    %v835 = vpop.f32.mrf.mxu0
    %v836 = vadd.f32 %v792, %v835
    %v837 = vpop.f32.mrf.mxu0
    %v838 = vadd.f32 %v794, %v837
    %839 = vmatmul.bf16.gmra.mxu0 %v755
    %v840 = vpop.f32.mrf.mxu0
    %v841 = vadd.f32 %v797, %v840
    %v842 = vpop.f32.mrf.mxu0
    %v843 = vadd.f32 %v799, %v842
    %844 = vdwg.mxu0
    %v845 = vpack.c.bf16 %v439, %v437
    %v846 = vpack.c.bf16 %v626, %v624
    %v847 = vpack.c.bf16 %v813, %v811
    %v848 = vpack.c.bf16 %v444, %v442
    %v849 = vpack.c.bf16 %v631, %v629
    %v850 = vpack.c.bf16 %v818, %v816
    %v851 = vpack.c.bf16 %v449, %v447
    %v852 = vpack.c.bf16 %v636, %v634
    %v853 = vpack.c.bf16 %v823, %v821
    %v854 = vpack.c.bf16 %v454, %v452
    %v855 = vpack.c.bf16 %v641, %v639
    %v856 = vpack.c.bf16 %v828, %v826
    %v857 = vpack.c.bf16 %v459, %v457
    %v858 = vpack.c.bf16 %v646, %v644
    %v859 = vpack.c.bf16 %v833, %v831
    %v860 = vpack.c.bf16 %v464, %v462
    %v861 = vpack.c.bf16 %v651, %v649
    %v862 = vpack.c.bf16 %v838, %v836
    %v863 = vpack.c.bf16 %v469, %v467
    %v864 = vpack.c.bf16 %v656, %v654
    %v865 = vpack.c.bf16 %v843, %v841
    %v866 = vld [vmem:[%s2] sm:$0xf]
    %v867 = vld [vmem:[%s2 + $0x4] sm:$0xf]
    %v868 = vld [vmem:[%s2 + $0x8] sm:$0xf]
    %v869 = vld [vmem:[%s2 + $0xc] sm:$0xf]
    %v870 = vld [vmem:[%s2 + $0x10] sm:$0xf]
    %v871 = vld [vmem:[%s2 + $0x14] sm:$0xf]
    %v872 = vld [vmem:[%s2 + $0x18] sm:$0xf]
    %v873 = vld [vmem:[%s2 + $0x1c] sm:$0xf]
    %v874 = vld [vmem:[%s2 + $0x20] sm:$0xf]
    %v875 = vld [vmem:[%s2 + $0x24] sm:$0xf]
    %v876 = vld [vmem:[%s2 + $0x28] sm:$0xf]
    %v877 = vld [vmem:[%s2 + $0x2c] sm:$0xf]
    %v878 = vld [vmem:[%s2 + $0x30] sm:$0xf]
    %v879 = vld [vmem:[%s2 + $0x34] sm:$0xf]
    %v880 = vld [vmem:[%s2 + $0x38] sm:$0xf]
    %v881 = vld [vmem:[%s2 + $0x3c] sm:$0xf]
    %v882 = vld [vmem:[%s2 + $0x40] sm:$0xf]
    %v883 = vld [vmem:[%s2 + $0x44] sm:$0xf]
    %v884 = vld [vmem:[%s2 + $0x48] sm:$0xf]
    %v885 = vld [vmem:[%s2 + $0x4c] sm:$0xf]
    %v886 = vld [vmem:[%s2 + $0x50] sm:$0xf]
    %v887 = vld [vmem:[%s2 + $0x54] sm:$0xf]
    %v888 = vld [vmem:[%s2 + $0x58] sm:$0xf]
    %v889 = vld [vmem:[%s2 + $0x5c] sm:$0xf]
    %v890 = vld [vmem:[%s2 + $0x60] sm:$0xf]
    %v891 = vld [vmem:[%s2 + $0x64] sm:$0xf]
    %v892 = vld [vmem:[%s2 + $0x68] sm:$0xf]
    %v893 = vld [vmem:[%s2 + $0x6c] sm:$0xf]
    %v894 = vld [vmem:[%s2 + $0x70] sm:$0xf]
    %v895 = vld [vmem:[%s2 + $0x74] sm:$0xf]
    %v896 = vld [vmem:[%s2 + $0x78] sm:$0xf]
    %v897 = vld [vmem:[%s2 + $0x7c] sm:$0xf]
    %v898 = vld [vmem:[%s2 + $0x80] sm:$0xf]
    %v899 = vld [vmem:[%s2 + $0x84] sm:$0xf]
    %v900 = vld [vmem:[%s2 + $0x88] sm:$0xf]
    %v901 = vld [vmem:[%s2 + $0x8c] sm:$0xf]
    %v902 = vld [vmem:[%s2 + $0x90] sm:$0xf]
    %v903 = vld [vmem:[%s2 + $0x94] sm:$0xf]
    %v904 = vld [vmem:[%s2 + $0x98] sm:$0xf]
    %v905 = vld [vmem:[%s2 + $0x9c] sm:$0xf]
    %v906 = vld [vmem:[%s2 + $0xa0] sm:$0xf]
    %v907 = vld [vmem:[%s2 + $0xa4] sm:$0xf]
    %v908 = vld [vmem:[%s2 + $0xa8] sm:$0xf]
    %v909 = vld [vmem:[%s2 + $0xac] sm:$0xf]
    %v910 = vld [vmem:[%s2 + $0xb0] sm:$0xf]
    %v911 = vld [vmem:[%s2 + $0xb4] sm:$0xf]
    %v912 = vld [vmem:[%s2 + $0xb8] sm:$0xf]
    %v913 = vld [vmem:[%s2 + $0xbc] sm:$0xf]
    %v914 = vld [vmem:[#allocation2] sm:$0x1]
    %v916 = vperm.slane %v914, 0
    %v966 = vunpack.c.l.b16 %v866
    %v967 = vunpack.c.l.b16 %v867
    %v968 = vunpack.c.l.b16 %v868
    %v969 = vunpack.c.l.b16 %v869
    %v970 = vunpack.c.l.b16 %v870
    %v971 = vunpack.c.l.b16 %v871
    %v972 = vunpack.c.l.b16 %v872
    %v973 = vunpack.c.l.b16 %v873
    %v974 = vunpack.c.l.b16 %v874
    %v975 = vunpack.c.l.b16 %v875
    %v976 = vunpack.c.l.b16 %v876
    %v977 = vunpack.c.l.b16 %v877
    %v978 = vunpack.c.l.b16 %v878
    %v979 = vunpack.c.l.b16 %v879
    %v980 = vunpack.c.l.b16 %v880
    %v981 = vunpack.c.l.b16 %v881
    %v982 = vunpack.c.l.b16 %v882
    %v983 = vunpack.c.l.b16 %v883
    %v984 = vunpack.c.l.b16 %v884
    %v985 = vunpack.c.l.b16 %v885
    %v986 = vunpack.c.l.b16 %v886
    %v987 = vunpack.c.l.b16 %v887
    %v988 = vunpack.c.l.b16 %v888
    %v989 = vunpack.c.l.b16 %v889
    %v990 = vunpack.c.l.b16 %v890
    %v991 = vunpack.c.l.b16 %v891
    %v992 = vunpack.c.l.b16 %v892
    %v993 = vunpack.c.l.b16 %v893
    %v994 = vunpack.c.l.b16 %v894
    %v995 = vunpack.c.l.b16 %v895
    %v996 = vunpack.c.l.b16 %v896
    %v997 = vunpack.c.l.b16 %v897
    %v998 = vunpack.c.l.b16 %v898
    %v999 = vunpack.c.l.b16 %v899
    %v1000 = vunpack.c.l.b16 %v900
    %v1001 = vunpack.c.l.b16 %v901
    %v1002 = vunpack.c.l.b16 %v902
    %v1003 = vunpack.c.l.b16 %v903
    %v1004 = vunpack.c.l.b16 %v904
    %v1005 = vunpack.c.l.b16 %v905
    %v1006 = vunpack.c.l.b16 %v906
    %v1007 = vunpack.c.l.b16 %v907
    %v1008 = vunpack.c.l.b16 %v908
    %v1009 = vunpack.c.l.b16 %v909
    %v1010 = vunpack.c.l.b16 %v910
    %v1011 = vunpack.c.l.b16 %v911
    %v1012 = vunpack.c.l.b16 %v912
    %v1013 = vunpack.c.l.b16 %v913
    %v1014 = vpack.c.b16 %v967, %v966
    %v1015 = vpack.c.b16 %v969, %v968
    %v1016 = vpack.c.b16 %v971, %v970
    %v1017 = vpack.c.b16 %v973, %v972
    %v1018 = vpack.c.b16 %v975, %v974
    %v1019 = vpack.c.b16 %v977, %v976
    %v1020 = vpack.c.b16 %v979, %v978
    %v1021 = vpack.c.b16 %v981, %v980
    %v1022 = vpack.c.b16 %v983, %v982
    %v1023 = vpack.c.b16 %v985, %v984
    %v1024 = vpack.c.b16 %v987, %v986
    %v1025 = vpack.c.b16 %v989, %v988
    %v1026 = vpack.c.b16 %v991, %v990
    %v1027 = vpack.c.b16 %v993, %v992
    %v1028 = vpack.c.b16 %v995, %v994
    %v1029 = vpack.c.b16 %v997, %v996
    %v1030 = vpack.c.b16 %v999, %v998
    %v1031 = vpack.c.b16 %v1001, %v1000
    %v1032 = vpack.c.b16 %v1003, %v1002
    %v1033 = vpack.c.b16 %v1005, %v1004
    %v1034 = vpack.c.b16 %v1007, %v1006
    %v1035 = vpack.c.b16 %v1009, %v1008
    %v1036 = vpack.c.b16 %v1011, %v1010
    %v1037 = vpack.c.b16 %v1013, %v1012
    %1062 = vmatpush.bf16.msra.mxu0 %v1021
    %1063 = vmatpush.bf16.msra.mxu0 %v1020
    %1064 = vmatpush.bf16.msra.mxu0 %v1019
    %1065 = vmatpush.bf16.msra.mxu0 %v1018
    %1066 = vmatpush.bf16.msra.mxu0 %v1017
    %1067 = vmatpush.bf16.msra.mxu0 %v1016
    %1068 = vmatpush.bf16.msra.mxu0 %v1015
    %1069 = vmatpush.bf16.msra.mxu0 %v1014
    %1070 = vmatmul.bf16.gmra.mxu0 %v845
    %v1071 = vpop.f32.mrf.mxu0
    %v1072 = vadd.f32 %v916, %v1071
    %v1073 = vpop.f32.mrf.mxu0
    %v1074 = vadd.f32 %v916, %v1073
    %1075 = vmatmul.bf16.gmra.mxu0 %v848
    %v1076 = vpop.f32.mrf.mxu0
    %v1077 = vadd.f32 %v916, %v1076
    %v1078 = vpop.f32.mrf.mxu0
    %v1079 = vadd.f32 %v916, %v1078
    %1080 = vmatmul.bf16.gmra.mxu0 %v851
    %v1081 = vpop.f32.mrf.mxu0
    %v1082 = vadd.f32 %v916, %v1081
    %v1083 = vpop.f32.mrf.mxu0
    %v1084 = vadd.f32 %v916, %v1083
    %1085 = vmatmul.bf16.gmra.mxu0 %v854
    %v1086 = vpop.f32.mrf.mxu0
    %v1087 = vadd.f32 %v916, %v1086
    %v1088 = vpop.f32.mrf.mxu0
    %v1089 = vadd.f32 %v916, %v1088
    %1090 = vmatmul.bf16.gmra.mxu0 %v857
    %v1091 = vpop.f32.mrf.mxu0
    %v1092 = vadd.f32 %v916, %v1091
    %v1093 = vpop.f32.mrf.mxu0
    %v1094 = vadd.f32 %v916, %v1093
    %1095 = vmatmul.bf16.gmra.mxu0 %v860
    %v1096 = vpop.f32.mrf.mxu0
    %v1097 = vadd.f32 %v916, %v1096
    %v1098 = vpop.f32.mrf.mxu0
    %v1099 = vadd.f32 %v916, %v1098
    %1100 = vmatmul.bf16.gmra.mxu0 %v863
    %v1101 = vpop.f32.mrf.mxu0
    %v1102 = vadd.f32 %v916, %v1101
    %v1103 = vpop.f32.mrf.mxu0
    %v1104 = vadd.f32 %v916, %v1103
    %1105 = vdwg.mxu0
    %1106 = vmatpush.bf16.msra.mxu0 %v1029
    %1107 = vmatpush.bf16.msra.mxu0 %v1028
    %1108 = vmatpush.bf16.msra.mxu0 %v1027
    %1109 = vmatpush.bf16.msra.mxu0 %v1026
    %1110 = vmatpush.bf16.msra.mxu0 %v1025
    %1111 = vmatpush.bf16.msra.mxu0 %v1024
    %1112 = vmatpush.bf16.msra.mxu0 %v1023
    %1113 = vmatpush.bf16.msra.mxu0 %v1022
    %1114 = vmatmul.bf16.gmra.mxu0 %v846
    %v1115 = vpop.f32.mrf.mxu0
    %v1116 = vadd.f32 %v1072, %v1115
    %v1117 = vpop.f32.mrf.mxu0
    %v1118 = vadd.f32 %v1074, %v1117
    %1119 = vmatmul.bf16.gmra.mxu0 %v849
    %v1120 = vpop.f32.mrf.mxu0
    %v1121 = vadd.f32 %v1077, %v1120
    %v1122 = vpop.f32.mrf.mxu0
    %v1123 = vadd.f32 %v1079, %v1122
    %1124 = vmatmul.bf16.gmra.mxu0 %v852
    %v1125 = vpop.f32.mrf.mxu0
    %v1126 = vadd.f32 %v1082, %v1125
    %v1127 = vpop.f32.mrf.mxu0
    %v1128 = vadd.f32 %v1084, %v1127
    %1129 = vmatmul.bf16.gmra.mxu0 %v855
    %v1130 = vpop.f32.mrf.mxu0
    %v1131 = vadd.f32 %v1087, %v1130
    %v1132 = vpop.f32.mrf.mxu0
    %v1133 = vadd.f32 %v1089, %v1132
    %1134 = vmatmul.bf16.gmra.mxu0 %v858
    %v1135 = vpop.f32.mrf.mxu0
    %v1136 = vadd.f32 %v1092, %v1135
    %v1137 = vpop.f32.mrf.mxu0
    %v1138 = vadd.f32 %v1094, %v1137
    %1139 = vmatmul.bf16.gmra.mxu0 %v861
    %v1140 = vpop.f32.mrf.mxu0
    %v1141 = vadd.f32 %v1097, %v1140
    %v1142 = vpop.f32.mrf.mxu0
    %v1143 = vadd.f32 %v1099, %v1142
    %1144 = vmatmul.bf16.gmra.mxu0 %v864
    %v1145 = vpop.f32.mrf.mxu0
    %v1146 = vadd.f32 %v1102, %v1145
    %v1147 = vpop.f32.mrf.mxu0
    %v1148 = vadd.f32 %v1104, %v1147
    %1149 = vdwg.mxu0
    %1150 = vmatpush.bf16.msra.mxu0 %v1037
    %1151 = vmatpush.bf16.msra.mxu0 %v1036
    %1152 = vmatpush.bf16.msra.mxu0 %v1035
    %1153 = vmatpush.bf16.msra.mxu0 %v1034
    %1154 = vmatpush.bf16.msra.mxu0 %v1033
    %1155 = vmatpush.bf16.msra.mxu0 %v1032
    %1156 = vmatpush.bf16.msra.mxu0 %v1031
    %1157 = vmatpush.bf16.msra.mxu0 %v1030
    %1158 = vmatmul.bf16.gmra.mxu0 %v847
    %v1159 = vpop.f32.mrf.mxu0
    %v1160 = vadd.f32 %v1116, %v1159
    %v1161 = vpop.f32.mrf.mxu0
    %v1162 = vadd.f32 %v1118, %v1161
    %1163 = vmatmul.bf16.gmra.mxu0 %v850
    %v1164 = vpop.f32.mrf.mxu0
    %v1165 = vadd.f32 %v1121, %v1164
    %v1166 = vpop.f32.mrf.mxu0
    %v1167 = vadd.f32 %v1123, %v1166
    %1168 = vmatmul.bf16.gmra.mxu0 %v853
    %v1169 = vpop.f32.mrf.mxu0
    %v1170 = vadd.f32 %v1126, %v1169
    %v1171 = vpop.f32.mrf.mxu0
    %v1172 = vadd.f32 %v1128, %v1171
    %1173 = vmatmul.bf16.gmra.mxu0 %v856
    %v1174 = vpop.f32.mrf.mxu0
    %v1175 = vadd.f32 %v1131, %v1174
    %v1176 = vpop.f32.mrf.mxu0
    %v1177 = vadd.f32 %v1133, %v1176
    %1178 = vmatmul.bf16.gmra.mxu0 %v859
    %v1179 = vpop.f32.mrf.mxu0
    %v1180 = vadd.f32 %v1136, %v1179
    %v1181 = vpop.f32.mrf.mxu0
    %v1182 = vadd.f32 %v1138, %v1181
    %1183 = vmatmul.bf16.gmra.mxu0 %v862
    %v1184 = vpop.f32.mrf.mxu0
    %v1185 = vadd.f32 %v1141, %v1184
    %v1186 = vpop.f32.mrf.mxu0
    %v1187 = vadd.f32 %v1143, %v1186
    %1188 = vmatmul.bf16.gmra.mxu0 %v865
    %v1189 = vpop.f32.mrf.mxu0
    %v1190 = vadd.f32 %v1146, %v1189
    %v1191 = vpop.f32.mrf.mxu0
    %v1192 = vadd.f32 %v1148, %v1191
    %1193 = vdwg.mxu0
    %v1194 = vmax.f32 %v1160, 0.0
    %v1195 = vmax.f32 %v1162, 0.0
    %v1196 = vmax.f32 %v1165, 0.0
    %v1197 = vmax.f32 %v1167, 0.0
    %v1198 = vmax.f32 %v1170, 0.0
    %v1199 = vmax.f32 %v1172, 0.0
    %v1200 = vmax.f32 %v1175, 0.0
    %v1201 = vmax.f32 %v1177, 0.0
    %v1202 = vmax.f32 %v1180, 0.0
    %v1203 = vmax.f32 %v1182, 0.0
    %v1204 = vmax.f32 %v1185, 0.0
    %v1205 = vmax.f32 %v1187, 0.0
    %v1206 = vmax.f32 %v1190, 0.0
    %v1207 = vmax.f32 %v1192, 0.0
    %v1208 = vpack.c.bf16 %v1195, %v1194
    %v1209 = vpack.c.bf16 %v1197, %v1196
    %v1210 = vpack.c.bf16 %v1199, %v1198
    %v1211 = vpack.c.bf16 %v1201, %v1200
    %v1212 = vpack.c.bf16 %v1203, %v1202
    %v1213 = vpack.c.bf16 %v1205, %v1204
    %v1214 = vpack.c.bf16 %v1207, %v1206
    %v1215 = vld [vmem:[#allocation4] sm:$0xf]
    %v1216 = vld [vmem:[#allocation4 + $0x4] sm:$0xf]
    %v1217 = vld [vmem:[#allocation4 + $0x8] sm:$0xf]
    %v1218 = vld [vmem:[#allocation4 + $0xc] sm:$0xf]
    %v1219 = vld [vmem:[#allocation4 + $0x10] sm:$0xf]
    %v1220 = vld [vmem:[#allocation4 + $0x14] sm:$0xf]
    %v1221 = vld [vmem:[#allocation4 + $0x18] sm:$0xf]
    %v1229 = vunpack.c.l.b16 %v1215
    %v1230 = vunpack.c.l.b16 %v1216
    %v1231 = vunpack.c.l.b16 %v1217
    %v1232 = vunpack.c.l.b16 %v1218
    %v1233 = vunpack.c.l.b16 %v1219
    %v1234 = vunpack.c.l.b16 %v1220
    %v1235 = vunpack.c.l.b16 %v1221
    %v1236 = vpack.c.b16 %v1230, %v1229
    %v1237 = vpack.c.b16 %v1232, %v1231
    %v1238 = vpack.c.b16 %v1234, %v1233
    %v1239 = vpack.c.b16 %v1235, %v1235
    %vm1240 = vcmask 916480
    %v1242 = vsel %vm1240, %v1236, 0
    %v1245 = vsel %vm1240, %v1237, 0
    %v1248 = vsel %vm1240, %v1238, 0
    %v1251 = vsel %vm1240, %v1239, 0
    %1253 = vmatpush.bf16.msra.mxu0 0
    %1254 = vmatpush.bf16.msra.mxu0 %v1214
    %1255 = vmatpush.bf16.msra.mxu0 %v1213
    %1256 = vmatpush.bf16.msra.mxu0 %v1212
    %1257 = vmatpush.bf16.msra.mxu0 %v1211
    %1258 = vmatpush.bf16.msra.mxu0 %v1210
    %1259 = vmatpush.bf16.msra.mxu0 %v1209
    %1260 = vmatpush.bf16.msra.mxu0 %v1208
    %1261 = vmatmul.bf16.gmra.mxu0 %v1242
    %v1262 = vpop.f32.mrf.mxu0
    %v1263 = vadd.f32 0.0, %v1262
    %v1264 = vpop.f32.mrf.mxu0
    %v1265 = vadd.f32 0.0, %v1264
    %1266 = vmatmul.bf16.gmra.mxu0 %v1245
    %v1267 = vpop.f32.mrf.mxu0
    %v1268 = vadd.f32 0.0, %v1267
    %v1269 = vpop.f32.mrf.mxu0
    %v1270 = vadd.f32 0.0, %v1269
    %1271 = vmatmul.bf16.gmra.mxu0 %v1248
    %v1272 = vpop.f32.mrf.mxu0
    %v1273 = vadd.f32 0.0, %v1272
    %v1274 = vpop.f32.mrf.mxu0
    %v1275 = vadd.f32 0.0, %v1274
    %1276 = vmatmul.bf16.gmra.mxu0 %v1251
    %v1277 = vpop.f32.mrf.mxu0
    %v1278 = vadd.f32 0.0, %v1277
    %v1279 = vpop.f32.mrf.mxu0
    %1280 = vdwg.mxu0
    %s1281 = scalar_lea.vmem [#allocation4], 28
    %v1282 = vld [vmem:[%s1281] sm:$0xf]
    %v1283 = vld [vmem:[%s1281 + $0x4] sm:$0xf]
    %v1284 = vld [vmem:[%s1281 + $0x8] sm:$0xf]
    %v1285 = vld [vmem:[%s1281 + $0xc] sm:$0xf]
    %v1286 = vld [vmem:[%s1281 + $0x10] sm:$0xf]
    %v1287 = vld [vmem:[%s1281 + $0x14] sm:$0xf]
    %v1288 = vld [vmem:[%s1281 + $0x18] sm:$0xf]
    %v1296 = vunpack.c.l.b16 %v1282
    %v1297 = vunpack.c.l.b16 %v1283
    %v1298 = vunpack.c.l.b16 %v1284
    %v1299 = vunpack.c.l.b16 %v1285
    %v1300 = vunpack.c.l.b16 %v1286
    %v1301 = vunpack.c.l.b16 %v1287
    %v1302 = vunpack.c.l.b16 %v1288
    %v1303 = vpack.c.b16 %v1297, %v1296
    %v1304 = vpack.c.b16 %v1299, %v1298
    %v1305 = vpack.c.b16 %v1301, %v1300
    %v1306 = vpack.c.b16 %v1302, %v1302
    %v1308 = vsel %vm1240, %v1303, 0
    %v1311 = vsel %vm1240, %v1304, 0
    %v1314 = vsel %vm1240, %v1305, 0
    %v1317 = vsel %vm1240, %v1306, 0
    %1319 = vmatpush.bf16.msra.mxu0 0
    %1320 = vmatpush.bf16.msra.mxu0 %v1214
    %1321 = vmatpush.bf16.msra.mxu0 %v1213
    %1322 = vmatpush.bf16.msra.mxu0 %v1212
    %1323 = vmatpush.bf16.msra.mxu0 %v1211
    %1324 = vmatpush.bf16.msra.mxu0 %v1210
    %1325 = vmatpush.bf16.msra.mxu0 %v1209
    %1326 = vmatpush.bf16.msra.mxu0 %v1208
    %1327 = vmatmul.bf16.gmra.mxu0 %v1308
    %v1328 = vpop.f32.mrf.mxu0
    %v1329 = vadd.f32 0.0, %v1328
    %v1330 = vpop.f32.mrf.mxu0
    %v1331 = vadd.f32 0.0, %v1330
    %1332 = vmatmul.bf16.gmra.mxu0 %v1311
    %v1333 = vpop.f32.mrf.mxu0
    %v1334 = vadd.f32 0.0, %v1333
    %v1335 = vpop.f32.mrf.mxu0
    %v1336 = vadd.f32 0.0, %v1335
    %1337 = vmatmul.bf16.gmra.mxu0 %v1314
    %v1338 = vpop.f32.mrf.mxu0
    %v1339 = vadd.f32 0.0, %v1338
    %v1340 = vpop.f32.mrf.mxu0
    %v1341 = vadd.f32 0.0, %v1340
    %1342 = vmatmul.bf16.gmra.mxu0 %v1317
    %v1343 = vpop.f32.mrf.mxu0
    %v1344 = vadd.f32 0.0, %v1343
    %v1345 = vpop.f32.mrf.mxu0
    %1346 = vdwg.mxu0
    %s1347 = scalar_lea.vmem [#allocation4], 56
    %v1348 = vld [vmem:[%s1347] sm:$0xf]
    %v1349 = vld [vmem:[%s1347 + $0x4] sm:$0xf]
    %v1350 = vld [vmem:[%s1347 + $0x8] sm:$0xf]
    %v1351 = vld [vmem:[%s1347 + $0xc] sm:$0xf]
    %v1352 = vld [vmem:[%s1347 + $0x10] sm:$0xf]
    %v1353 = vld [vmem:[%s1347 + $0x14] sm:$0xf]
    %v1354 = vld [vmem:[%s1347 + $0x18] sm:$0xf]
    %v1362 = vunpack.c.l.b16 %v1348
    %v1363 = vunpack.c.l.b16 %v1349
    %v1364 = vunpack.c.l.b16 %v1350
    %v1365 = vunpack.c.l.b16 %v1351
    %v1366 = vunpack.c.l.b16 %v1352
    %v1367 = vunpack.c.l.b16 %v1353
    %v1368 = vunpack.c.l.b16 %v1354
    %v1369 = vpack.c.b16 %v1363, %v1362
    %v1370 = vpack.c.b16 %v1365, %v1364
    %v1371 = vpack.c.b16 %v1367, %v1366
    %v1372 = vpack.c.b16 %v1368, %v1368
    %v1374 = vsel %vm1240, %v1369, 0
    %v1377 = vsel %vm1240, %v1370, 0
    %v1380 = vsel %vm1240, %v1371, 0
    %v1383 = vsel %vm1240, %v1372, 0
    %1385 = vmatpush.bf16.msra.mxu0 0
    %1386 = vmatpush.bf16.msra.mxu0 %v1214
    %1387 = vmatpush.bf16.msra.mxu0 %v1213
    %1388 = vmatpush.bf16.msra.mxu0 %v1212
    %1389 = vmatpush.bf16.msra.mxu0 %v1211
    %1390 = vmatpush.bf16.msra.mxu0 %v1210
    %1391 = vmatpush.bf16.msra.mxu0 %v1209
    %1392 = vmatpush.bf16.msra.mxu0 %v1208
    %1393 = vmatmul.bf16.gmra.mxu0 %v1374
    %v1394 = vpop.f32.mrf.mxu0
    %v1395 = vadd.f32 0.0, %v1394
    %v1396 = vpop.f32.mrf.mxu0
    %v1397 = vadd.f32 0.0, %v1396
    %1398 = vmatmul.bf16.gmra.mxu0 %v1377
    %v1399 = vpop.f32.mrf.mxu0
    %v1400 = vadd.f32 0.0, %v1399
    %v1401 = vpop.f32.mrf.mxu0
    %v1402 = vadd.f32 0.0, %v1401
    %1403 = vmatmul.bf16.gmra.mxu0 %v1380
    %v1404 = vpop.f32.mrf.mxu0
    %v1405 = vadd.f32 0.0, %v1404
    %v1406 = vpop.f32.mrf.mxu0
    %v1407 = vadd.f32 0.0, %v1406
    %1408 = vmatmul.bf16.gmra.mxu0 %v1383
    %v1409 = vpop.f32.mrf.mxu0
    %v1410 = vadd.f32 0.0, %v1409
    %v1411 = vpop.f32.mrf.mxu0
    %1412 = vdwg.mxu0
    %v1413 = vpack.c.bf16 %v1265, %v1263
    %v1414 = vpack.c.bf16 %v1331, %v1329
    %v1415 = vpack.c.bf16 %v1397, %v1395
    %v1416 = vpack.c.bf16 %v1270, %v1268
    %v1417 = vpack.c.bf16 %v1336, %v1334
    %v1418 = vpack.c.bf16 %v1402, %v1400
    %v1419 = vpack.c.bf16 %v1275, %v1273
    %v1420 = vpack.c.bf16 %v1341, %v1339
    %v1421 = vpack.c.bf16 %v1407, %v1405
    %v1422 = vpack.c.bf16 %v1278, %v1278
    %v1423 = vpack.c.bf16 %v1344, %v1344
    %v1424 = vpack.c.bf16 %v1410, %v1410
    %v1425 = vld [vmem:[#allocation6] sm:$0xf]
    %v1426 = vld [vmem:[#allocation6 + $0x4] sm:$0xf]
    %v1427 = vld [vmem:[#allocation6 + $0x8] sm:$0xf]
    %v1428 = vld [vmem:[#allocation6 + $0xc] sm:$0xf]
    %v1429 = vld [vmem:[#allocation6 + $0x10] sm:$0xf]
    %v1430 = vld [vmem:[#allocation6 + $0x14] sm:$0xf]
    %v1431 = vld [vmem:[#allocation6 + $0x18] sm:$0xf]
    %v1432 = vld [vmem:[#allocation6 + $0x1c] sm:$0xf]
    %v1433 = vld [vmem:[#allocation6 + $0x20] sm:$0xf]
    %v1434 = vld [vmem:[#allocation6 + $0x24] sm:$0xf]
    %v1435 = vld [vmem:[#allocation6 + $0x28] sm:$0xf]
    %v1436 = vld [vmem:[#allocation6 + $0x2c] sm:$0xf]
    %v1437 = vld [vmem:[#allocation6 + $0x30] sm:$0xf]
    %v1438 = vld [vmem:[#allocation6 + $0x34] sm:$0xf]
    %v1439 = vld [vmem:[#allocation6 + $0x38] sm:$0xf]
    %v1440 = vld [vmem:[#allocation6 + $0x3c] sm:$0xf]
    %v1441 = vld [vmem:[#allocation6 + $0x40] sm:$0xf]
    %v1442 = vld [vmem:[#allocation6 + $0x44] sm:$0xf]
    %v1443 = vld [vmem:[#allocation6 + $0x48] sm:$0xf]
    %v1444 = vld [vmem:[#allocation6 + $0x4c] sm:$0xf]
    %v1445 = vld [vmem:[#allocation6 + $0x50] sm:$0xf]
    %v1446 = vld [vmem:[#allocation6 + $0x54] sm:$0xf]
    %v1447 = vld [vmem:[#allocation6 + $0x58] sm:$0xf]
    %v1448 = vld [vmem:[#allocation6 + $0x5c] sm:$0xf]
    %v1449 = vld [vmem:[#allocation6 + $0x60] sm:$0xf]
    %v1450 = vld [vmem:[#allocation6 + $0x64] sm:$0xf]
    %v1451 = vld [vmem:[#allocation6 + $0x68] sm:$0xf]
    %v1452 = vld [vmem:[#allocation6 + $0x6c] sm:$0xf]
    %v1453 = vld [vmem:[#allocation6 + $0x70] sm:$0xf]
    %v1454 = vld [vmem:[#allocation6 + $0x74] sm:$0xf]
    %v1455 = vld [vmem:[#allocation6 + $0x78] sm:$0xf]
    %v1456 = vld [vmem:[#allocation6 + $0x7c] sm:$0xf]
    %v1457 = vld [vmem:[#allocation6 + $0x80] sm:$0xf]
    %v1458 = vld [vmem:[#allocation6 + $0x84] sm:$0xf]
    %v1459 = vld [vmem:[#allocation6 + $0x88] sm:$0xf]
    %v1460 = vld [vmem:[#allocation6 + $0x8c] sm:$0xf]
    %v1461 = vld [vmem:[#allocation6 + $0x90] sm:$0xf]
    %v1462 = vld [vmem:[#allocation6 + $0x94] sm:$0xf]
    %v1463 = vld [vmem:[#allocation6 + $0x98] sm:$0xf]
    %v1464 = vld [vmem:[#allocation6 + $0x9c] sm:$0xf]
    %v1465 = vld [vmem:[#allocation6 + $0xa0] sm:$0xf]
    %v1466 = vld [vmem:[#allocation6 + $0xa4] sm:$0xf]
    %v1467 = vld [vmem:[#allocation6 + $0xa8] sm:$0xf]
    %v1468 = vld [vmem:[#allocation6 + $0xac] sm:$0xf]
    %v1469 = vld [vmem:[#allocation6 + $0xb0] sm:$0xf]
    %v1470 = vld [vmem:[#allocation6 + $0xb4] sm:$0xf]
    %v1471 = vld [vmem:[#allocation6 + $0xb8] sm:$0xf]
    %v1472 = vld [vmem:[#allocation6 + $0xbc] sm:$0xf]
    %v1473 = vld [vmem:[#allocation7] sm:$0x1]
    %v1475 = vperm.slane %v1473, 0
    %v1525 = vunpack.c.l.b16 %v1425
    %v1526 = vunpack.c.l.b16 %v1426
    %v1527 = vunpack.c.l.b16 %v1427
    %v1528 = vunpack.c.l.b16 %v1428
    %v1529 = vunpack.c.l.b16 %v1429
    %v1530 = vunpack.c.l.b16 %v1430
    %v1531 = vunpack.c.l.b16 %v1431
    %v1532 = vunpack.c.l.b16 %v1432
    %v1533 = vunpack.c.l.b16 %v1433
    %v1534 = vunpack.c.l.b16 %v1434
    %v1535 = vunpack.c.l.b16 %v1435
    %v1536 = vunpack.c.l.b16 %v1436
    %v1537 = vunpack.c.l.b16 %v1437
    %v1538 = vunpack.c.l.b16 %v1438
    %v1539 = vunpack.c.l.b16 %v1439
    %v1540 = vunpack.c.l.b16 %v1440
    %v1541 = vunpack.c.l.b16 %v1441
    %v1542 = vunpack.c.l.b16 %v1442
    %v1543 = vunpack.c.l.b16 %v1443
    %v1544 = vunpack.c.l.b16 %v1444
    %v1545 = vunpack.c.l.b16 %v1445
    %v1546 = vunpack.c.l.b16 %v1446
    %v1547 = vunpack.c.l.b16 %v1447
    %v1548 = vunpack.c.l.b16 %v1448
    %v1549 = vunpack.c.l.b16 %v1449
    %v1550 = vunpack.c.l.b16 %v1450
    %v1551 = vunpack.c.l.b16 %v1451
    %v1552 = vunpack.c.l.b16 %v1452
    %v1553 = vunpack.c.l.b16 %v1453
    %v1554 = vunpack.c.l.b16 %v1454
    %v1555 = vunpack.c.l.b16 %v1455
    %v1556 = vunpack.c.l.b16 %v1456
    %v1557 = vunpack.c.l.b16 %v1457
    %v1558 = vunpack.c.l.b16 %v1458
    %v1559 = vunpack.c.l.b16 %v1459
    %v1560 = vunpack.c.l.b16 %v1460
    %v1561 = vunpack.c.l.b16 %v1461
    %v1562 = vunpack.c.l.b16 %v1462
    %v1563 = vunpack.c.l.b16 %v1463
    %v1564 = vunpack.c.l.b16 %v1464
    %v1565 = vunpack.c.l.b16 %v1465
    %v1566 = vunpack.c.l.b16 %v1466
    %v1567 = vunpack.c.l.b16 %v1467
    %v1568 = vunpack.c.l.b16 %v1468
    %v1569 = vunpack.c.l.b16 %v1469
    %v1570 = vunpack.c.l.b16 %v1470
    %v1571 = vunpack.c.l.b16 %v1471
    %v1572 = vunpack.c.l.b16 %v1472
    %v1573 = vpack.c.b16 %v1526, %v1525
    %v1574 = vpack.c.b16 %v1528, %v1527
    %v1575 = vpack.c.b16 %v1530, %v1529
    %v1576 = vpack.c.b16 %v1532, %v1531
    %v1577 = vpack.c.b16 %v1534, %v1533
    %v1578 = vpack.c.b16 %v1536, %v1535
    %v1579 = vpack.c.b16 %v1538, %v1537
    %v1580 = vpack.c.b16 %v1540, %v1539
    %v1581 = vpack.c.b16 %v1542, %v1541
    %v1582 = vpack.c.b16 %v1544, %v1543
    %v1583 = vpack.c.b16 %v1546, %v1545
    %v1584 = vpack.c.b16 %v1548, %v1547
    %v1585 = vpack.c.b16 %v1550, %v1549
    %v1586 = vpack.c.b16 %v1552, %v1551
    %v1587 = vpack.c.b16 %v1554, %v1553
    %v1588 = vpack.c.b16 %v1556, %v1555
    %v1589 = vpack.c.b16 %v1558, %v1557
    %v1590 = vpack.c.b16 %v1560, %v1559
    %v1591 = vpack.c.b16 %v1562, %v1561
    %v1592 = vpack.c.b16 %v1564, %v1563
    %v1593 = vpack.c.b16 %v1566, %v1565
    %v1594 = vpack.c.b16 %v1568, %v1567
    %v1595 = vpack.c.b16 %v1570, %v1569
    %v1596 = vpack.c.b16 %v1572, %v1571
    %1621 = vmatpush.bf16.msra.mxu0 %v1580
    %1622 = vmatpush.bf16.msra.mxu0 %v1579
    %1623 = vmatpush.bf16.msra.mxu0 %v1578
    %1624 = vmatpush.bf16.msra.mxu0 %v1577
    %1625 = vmatpush.bf16.msra.mxu0 %v1576
    %1626 = vmatpush.bf16.msra.mxu0 %v1575
    %1627 = vmatpush.bf16.msra.mxu0 %v1574
    %1628 = vmatpush.bf16.msra.mxu0 %v1573
    %1629 = vmatmul.bf16.gmra.mxu0 %v1413
    %v1630 = vpop.f32.mrf.mxu0
    %v1631 = vadd.f32 %v1475, %v1630
    %v1632 = vpop.f32.mrf.mxu0
    %v1633 = vadd.f32 %v1475, %v1632
    %1634 = vmatmul.bf16.gmra.mxu0 %v1416
    %v1635 = vpop.f32.mrf.mxu0
    %v1636 = vadd.f32 %v1475, %v1635
    %v1637 = vpop.f32.mrf.mxu0
    %v1638 = vadd.f32 %v1475, %v1637
    %1639 = vmatmul.bf16.gmra.mxu0 %v1419
    %v1640 = vpop.f32.mrf.mxu0
    %v1641 = vadd.f32 %v1475, %v1640
    %v1642 = vpop.f32.mrf.mxu0
    %v1643 = vadd.f32 %v1475, %v1642
    %1644 = vmatmul.bf16.gmra.mxu0 %v1422
    %v1645 = vpop.f32.mrf.mxu0
    %v1646 = vadd.f32 %v1475, %v1645
    %v1647 = vpop.f32.mrf.mxu0
    %1648 = vdwg.mxu0
    %1649 = vmatpush.bf16.msra.mxu0 %v1588
    %1650 = vmatpush.bf16.msra.mxu0 %v1587
    %1651 = vmatpush.bf16.msra.mxu0 %v1586
    %1652 = vmatpush.bf16.msra.mxu0 %v1585
    %1653 = vmatpush.bf16.msra.mxu0 %v1584
    %1654 = vmatpush.bf16.msra.mxu0 %v1583
    %1655 = vmatpush.bf16.msra.mxu0 %v1582
    %1656 = vmatpush.bf16.msra.mxu0 %v1581
    %1657 = vmatmul.bf16.gmra.mxu0 %v1414
    %v1658 = vpop.f32.mrf.mxu0
    %v1659 = vadd.f32 %v1631, %v1658
    %v1660 = vpop.f32.mrf.mxu0
    %v1661 = vadd.f32 %v1633, %v1660
    %1662 = vmatmul.bf16.gmra.mxu0 %v1417
    %v1663 = vpop.f32.mrf.mxu0
    %v1664 = vadd.f32 %v1636, %v1663
    %v1665 = vpop.f32.mrf.mxu0
    %v1666 = vadd.f32 %v1638, %v1665
    %1667 = vmatmul.bf16.gmra.mxu0 %v1420
    %v1668 = vpop.f32.mrf.mxu0
    %v1669 = vadd.f32 %v1641, %v1668
    %v1670 = vpop.f32.mrf.mxu0
    %v1671 = vadd.f32 %v1643, %v1670
    %1672 = vmatmul.bf16.gmra.mxu0 %v1423
    %v1673 = vpop.f32.mrf.mxu0
    %v1674 = vadd.f32 %v1646, %v1673
    %v1675 = vpop.f32.mrf.mxu0
    %1676 = vdwg.mxu0
    %1677 = vmatpush.bf16.msra.mxu0 %v1596
    %1678 = vmatpush.bf16.msra.mxu0 %v1595
    %1679 = vmatpush.bf16.msra.mxu0 %v1594
    %1680 = vmatpush.bf16.msra.mxu0 %v1593
    %1681 = vmatpush.bf16.msra.mxu0 %v1592
    %1682 = vmatpush.bf16.msra.mxu0 %v1591
    %1683 = vmatpush.bf16.msra.mxu0 %v1590
    %1684 = vmatpush.bf16.msra.mxu0 %v1589
    %1685 = vmatmul.bf16.gmra.mxu0 %v1415
    %v1686 = vpop.f32.mrf.mxu0
    %v1687 = vadd.f32 %v1659, %v1686
    %v1688 = vpop.f32.mrf.mxu0
    %v1689 = vadd.f32 %v1661, %v1688
    %1690 = vmatmul.bf16.gmra.mxu0 %v1418
    %v1691 = vpop.f32.mrf.mxu0
    %v1692 = vadd.f32 %v1664, %v1691
    %v1693 = vpop.f32.mrf.mxu0
    %v1694 = vadd.f32 %v1666, %v1693
    %1695 = vmatmul.bf16.gmra.mxu0 %v1421
    %v1696 = vpop.f32.mrf.mxu0
    %v1697 = vadd.f32 %v1669, %v1696
    %v1698 = vpop.f32.mrf.mxu0
    %v1699 = vadd.f32 %v1671, %v1698
    %1700 = vmatmul.bf16.gmra.mxu0 %v1424
    %v1701 = vpop.f32.mrf.mxu0
    %v1702 = vadd.f32 %v1674, %v1701
    %v1703 = vpop.f32.mrf.mxu0
    %1704 = vdwg.mxu0
    %v1705 = vmax.f32 %v1687, 0.0
    %v1706 = vmax.f32 %v1689, 0.0
    %v1707 = vmax.f32 %v1692, 0.0
    %v1708 = vmax.f32 %v1694, 0.0
    %v1709 = vmax.f32 %v1697, 0.0
    %v1710 = vmax.f32 %v1699, 0.0
    %v1711 = vmax.f32 %v1702, 0.0
    %v1712 = vpack.c.bf16 %v1706, %v1705
    %v1713 = vpack.c.bf16 %v1708, %v1707
    %v1714 = vpack.c.bf16 %v1710, %v1709
    %v1715 = vpack.c.bf16 %v1711, %v1711
    %v1716 = vld [vmem:[#allocation9] sm:$0xf]
    %v1717 = vld [vmem:[#allocation9 + $0x4] sm:$0xf]
    %v1718 = vld [vmem:[#allocation9 + $0x8] sm:$0xf]
    %v1722 = vunpack.c.l.b16 %v1716
    %v1723 = vunpack.c.l.b16 %v1717
    %v1724 = vunpack.c.l.b16 %v1718
    %v1725 = vpack.c.b16 %v1723, %v1722
    %v1726 = vpack.c.b16 %v1724, %v1724
    %vm1727 = vcmask 457728
    %v1729 = vsel %vm1727, %v1725, 0
    %v1732 = vsel %vm1727, %v1726, 0
    %vm1734 = vcmask 1043456
    %v1736 = vsel %vm1734, %v1715, 0
    %1738 = vmatpush.bf16.msra.mxu0 0
    %1739 = vmatpush.bf16.msra.mxu0 0
    %1740 = vmatpush.bf16.msra.mxu0 0
    %1741 = vmatpush.bf16.msra.mxu0 0
    %1742 = vmatpush.bf16.msra.mxu0 %v1736
    %1743 = vmatpush.bf16.msra.mxu0 %v1714
    %1744 = vmatpush.bf16.msra.mxu0 %v1713
    %1745 = vmatpush.bf16.msra.mxu0 %v1712
    %1746 = vmatmul.bf16.gmra.mxu0 %v1729
    %v1747 = vpop.f32.mrf.mxu0
    %v1748 = vadd.f32 0.0, %v1747
    %v1749 = vpop.f32.mrf.mxu0
    %v1750 = vadd.f32 0.0, %v1749
    %1751 = vmatmul.bf16.gmra.mxu0 %v1732
    %v1752 = vpop.f32.mrf.mxu0
    %v1753 = vadd.f32 0.0, %v1752
    %v1754 = vpop.f32.mrf.mxu0
    %1755 = vdwg.mxu0
    %s1756 = scalar_lea.vmem [#allocation9], 12
    %v1757 = vld [vmem:[%s1756] sm:$0xf]
    %v1758 = vld [vmem:[%s1756 + $0x4] sm:$0xf]
    %v1759 = vld [vmem:[%s1756 + $0x8] sm:$0xf]
    %v1763 = vunpack.c.l.b16 %v1757
    %v1764 = vunpack.c.l.b16 %v1758
    %v1765 = vunpack.c.l.b16 %v1759
    %v1766 = vpack.c.b16 %v1764, %v1763
    %v1767 = vpack.c.b16 %v1765, %v1765
    %v1769 = vsel %vm1727, %v1766, 0
    %v1772 = vsel %vm1727, %v1767, 0
    %1774 = vmatpush.bf16.msra.mxu0 0
    %1775 = vmatpush.bf16.msra.mxu0 0
    %1776 = vmatpush.bf16.msra.mxu0 0
    %1777 = vmatpush.bf16.msra.mxu0 0
    %1778 = vmatpush.bf16.msra.mxu0 %v1736
    %1779 = vmatpush.bf16.msra.mxu0 %v1714
    %1780 = vmatpush.bf16.msra.mxu0 %v1713
    %1781 = vmatpush.bf16.msra.mxu0 %v1712
    %1782 = vmatmul.bf16.gmra.mxu0 %v1769
    %v1783 = vpop.f32.mrf.mxu0
    %v1784 = vadd.f32 0.0, %v1783
    %v1785 = vpop.f32.mrf.mxu0
    %v1786 = vadd.f32 0.0, %v1785
    %1787 = vmatmul.bf16.gmra.mxu0 %v1772
    %v1788 = vpop.f32.mrf.mxu0
    %v1789 = vadd.f32 0.0, %v1788
    %v1790 = vpop.f32.mrf.mxu0
    %1791 = vdwg.mxu0
    %s1792 = scalar_lea.vmem [#allocation9], 24
    %v1793 = vld [vmem:[%s1792] sm:$0xf]
    %v1794 = vld [vmem:[%s1792 + $0x4] sm:$0xf]
    %v1795 = vld [vmem:[%s1792 + $0x8] sm:$0xf]
    %v1799 = vunpack.c.l.b16 %v1793
    %v1800 = vunpack.c.l.b16 %v1794
    %v1801 = vunpack.c.l.b16 %v1795
    %v1802 = vpack.c.b16 %v1800, %v1799
    %v1803 = vpack.c.b16 %v1801, %v1801
    %v1805 = vsel %vm1727, %v1802, 0
    %v1808 = vsel %vm1727, %v1803, 0
    %1810 = vmatpush.bf16.msra.mxu0 0
    %1811 = vmatpush.bf16.msra.mxu0 0
    %1812 = vmatpush.bf16.msra.mxu0 0
    %1813 = vmatpush.bf16.msra.mxu0 0
    %1814 = vmatpush.bf16.msra.mxu0 %v1736
    %1815 = vmatpush.bf16.msra.mxu0 %v1714
    %1816 = vmatpush.bf16.msra.mxu0 %v1713
    %1817 = vmatpush.bf16.msra.mxu0 %v1712
    %1818 = vmatmul.bf16.gmra.mxu0 %v1805
    %v1819 = vpop.f32.mrf.mxu0
    %v1820 = vadd.f32 0.0, %v1819
    %v1821 = vpop.f32.mrf.mxu0
    %v1822 = vadd.f32 0.0, %v1821
    %1823 = vmatmul.bf16.gmra.mxu0 %v1808
    %v1824 = vpop.f32.mrf.mxu0
    %v1825 = vadd.f32 0.0, %v1824
    %v1826 = vpop.f32.mrf.mxu0
    %1827 = vdwg.mxu0
    %v1828 = vpack.c.bf16 %v1750, %v1748
    %v1829 = vpack.c.bf16 %v1786, %v1784
    %v1830 = vpack.c.bf16 %v1822, %v1820
    %v1831 = vpack.c.bf16 %v1753, %v1753
    %v1832 = vpack.c.bf16 %v1789, %v1789
    %v1833 = vpack.c.bf16 %v1825, %v1825
    %v1834 = vld [vmem:[#allocation10] sm:$0xf]
    %v1835 = vld [vmem:[#allocation10 + $0x4] sm:$0xf]
    %v1836 = vld [vmem:[#allocation10 + $0x8] sm:$0xf]
    %v1837 = vld [vmem:[#allocation10 + $0xc] sm:$0xf]
    %v1838 = vld [vmem:[#allocation10 + $0x10] sm:$0xf]
    %v1839 = vld [vmem:[#allocation10 + $0x14] sm:$0xf]
    %v1840 = vld [vmem:[#allocation10 + $0x18] sm:$0xf]
    %v1841 = vld [vmem:[#allocation10 + $0x1c] sm:$0xf]
    %v1842 = vld [vmem:[#allocation10 + $0x20] sm:$0xf]
    %v1843 = vld [vmem:[#allocation10 + $0x24] sm:$0xf]
    %v1844 = vld [vmem:[#allocation10 + $0x28] sm:$0xf]
    %v1845 = vld [vmem:[#allocation10 + $0x2c] sm:$0xf]
    %v1846 = vld [vmem:[#allocation10 + $0x30] sm:$0xf]
    %v1847 = vld [vmem:[#allocation10 + $0x34] sm:$0xf]
    %v1848 = vld [vmem:[#allocation10 + $0x38] sm:$0xf]
    %v1849 = vld [vmem:[#allocation10 + $0x3c] sm:$0xf]
    %v1850 = vld [vmem:[#allocation10 + $0x40] sm:$0xf]
    %v1851 = vld [vmem:[#allocation10 + $0x44] sm:$0xf]
    %v1852 = vld [vmem:[#allocation10 + $0x48] sm:$0xf]
    %v1853 = vld [vmem:[#allocation10 + $0x4c] sm:$0xf]
    %v1854 = vld [vmem:[#allocation10 + $0x50] sm:$0xf]
    %v1855 = vld [vmem:[#allocation10 + $0x54] sm:$0xf]
    %v1856 = vld [vmem:[#allocation10 + $0x58] sm:$0xf]
    %v1857 = vld [vmem:[#allocation10 + $0x5c] sm:$0xf]
    %v1858 = vld [vmem:[#allocation10 + $0x60] sm:$0xf]
    %v1859 = vld [vmem:[#allocation10 + $0x64] sm:$0xf]
    %v1860 = vld [vmem:[#allocation10 + $0x68] sm:$0xf]
    %v1861 = vld [vmem:[#allocation10 + $0x6c] sm:$0xf]
    %v1862 = vld [vmem:[#allocation10 + $0x70] sm:$0xf]
    %v1863 = vld [vmem:[#allocation10 + $0x74] sm:$0xf]
    %v1864 = vld [vmem:[#allocation10 + $0x78] sm:$0xf]
    %v1865 = vld [vmem:[#allocation10 + $0x7c] sm:$0xf]
    %v1866 = vld [vmem:[#allocation10 + $0x80] sm:$0xf]
    %v1867 = vld [vmem:[#allocation10 + $0x84] sm:$0xf]
    %v1868 = vld [vmem:[#allocation10 + $0x88] sm:$0xf]
    %v1869 = vld [vmem:[#allocation10 + $0x8c] sm:$0xf]
    %v1870 = vld [vmem:[#allocation10 + $0x90] sm:$0xf]
    %v1871 = vld [vmem:[#allocation10 + $0x94] sm:$0xf]
    %v1872 = vld [vmem:[#allocation10 + $0x98] sm:$0xf]
    %v1873 = vld [vmem:[#allocation10 + $0x9c] sm:$0xf]
    %v1874 = vld [vmem:[#allocation10 + $0xa0] sm:$0xf]
    %v1875 = vld [vmem:[#allocation10 + $0xa4] sm:$0xf]
    %v1876 = vld [vmem:[#allocation10 + $0xa8] sm:$0xf]
    %v1877 = vld [vmem:[#allocation10 + $0xac] sm:$0xf]
    %v1878 = vld [vmem:[#allocation10 + $0xb0] sm:$0xf]
    %v1879 = vld [vmem:[#allocation10 + $0xb4] sm:$0xf]
    %v1880 = vld [vmem:[#allocation10 + $0xb8] sm:$0xf]
    %v1881 = vld [vmem:[#allocation10 + $0xbc] sm:$0xf]
    %v1882 = vld [vmem:[%s9] sm:$0x1]
    %v1884 = vperm.slane %v1882, 0
    %v1934 = vunpack.c.l.b16 %v1834
    %v1935 = vunpack.c.l.b16 %v1835
    %v1936 = vunpack.c.l.b16 %v1836
    %v1937 = vunpack.c.l.b16 %v1837
    %v1938 = vunpack.c.l.b16 %v1838
    %v1939 = vunpack.c.l.b16 %v1839
    %v1940 = vunpack.c.l.b16 %v1840
    %v1941 = vunpack.c.l.b16 %v1841
    %v1942 = vunpack.c.l.b16 %v1842
    %v1943 = vunpack.c.l.b16 %v1843
    %v1944 = vunpack.c.l.b16 %v1844
    %v1945 = vunpack.c.l.b16 %v1845
    %v1946 = vunpack.c.l.b16 %v1846
    %v1947 = vunpack.c.l.b16 %v1847
    %v1948 = vunpack.c.l.b16 %v1848
    %v1949 = vunpack.c.l.b16 %v1849
    %v1950 = vunpack.c.l.b16 %v1850
    %v1951 = vunpack.c.l.b16 %v1851
    %v1952 = vunpack.c.l.b16 %v1852
    %v1953 = vunpack.c.l.b16 %v1853
    %v1954 = vunpack.c.l.b16 %v1854
    %v1955 = vunpack.c.l.b16 %v1855
    %v1956 = vunpack.c.l.b16 %v1856
    %v1957 = vunpack.c.l.b16 %v1857
    %v1958 = vunpack.c.l.b16 %v1858
    %v1959 = vunpack.c.l.b16 %v1859
    %v1960 = vunpack.c.l.b16 %v1860
    %v1961 = vunpack.c.l.b16 %v1861
    %v1962 = vunpack.c.l.b16 %v1862
    %v1963 = vunpack.c.l.b16 %v1863
    %v1964 = vunpack.c.l.b16 %v1864
    %v1965 = vunpack.c.l.b16 %v1865
    %v1966 = vunpack.c.l.b16 %v1866
    %v1967 = vunpack.c.l.b16 %v1867
    %v1968 = vunpack.c.l.b16 %v1868
    %v1969 = vunpack.c.l.b16 %v1869
    %v1970 = vunpack.c.l.b16 %v1870
    %v1971 = vunpack.c.l.b16 %v1871
    %v1972 = vunpack.c.l.b16 %v1872
    %v1973 = vunpack.c.l.b16 %v1873
    %v1974 = vunpack.c.l.b16 %v1874
    %v1975 = vunpack.c.l.b16 %v1875
    %v1976 = vunpack.c.l.b16 %v1876
    %v1977 = vunpack.c.l.b16 %v1877
    %v1978 = vunpack.c.l.b16 %v1878
    %v1979 = vunpack.c.l.b16 %v1879
    %v1980 = vunpack.c.l.b16 %v1880
    %v1981 = vunpack.c.l.b16 %v1881
    %v1982 = vpack.c.b16 %v1935, %v1934
    %v1983 = vpack.c.b16 %v1937, %v1936
    %v1984 = vpack.c.b16 %v1939, %v1938
    %v1985 = vpack.c.b16 %v1941, %v1940
    %v1986 = vpack.c.b16 %v1943, %v1942
    %v1987 = vpack.c.b16 %v1945, %v1944
    %v1988 = vpack.c.b16 %v1947, %v1946
    %v1989 = vpack.c.b16 %v1949, %v1948
    %v1990 = vpack.c.b16 %v1951, %v1950
    %v1991 = vpack.c.b16 %v1953, %v1952
    %v1992 = vpack.c.b16 %v1955, %v1954
    %v1993 = vpack.c.b16 %v1957, %v1956
    %v1994 = vpack.c.b16 %v1959, %v1958
    %v1995 = vpack.c.b16 %v1961, %v1960
    %v1996 = vpack.c.b16 %v1963, %v1962
    %v1997 = vpack.c.b16 %v1965, %v1964
    %v1998 = vpack.c.b16 %v1967, %v1966
    %v1999 = vpack.c.b16 %v1969, %v1968
    %v2000 = vpack.c.b16 %v1971, %v1970
    %v2001 = vpack.c.b16 %v1973, %v1972
    %v2002 = vpack.c.b16 %v1975, %v1974
    %v2003 = vpack.c.b16 %v1977, %v1976
    %v2004 = vpack.c.b16 %v1979, %v1978
    %v2005 = vpack.c.b16 %v1981, %v1980
    %2030 = vmatpush.bf16.msra.mxu0 %v1989
    %2031 = vmatpush.bf16.msra.mxu0 %v1988
    %2032 = vmatpush.bf16.msra.mxu0 %v1987
    %2033 = vmatpush.bf16.msra.mxu0 %v1986
    %2034 = vmatpush.bf16.msra.mxu0 %v1985
    %2035 = vmatpush.bf16.msra.mxu0 %v1984
    %2036 = vmatpush.bf16.msra.mxu0 %v1983
    %2037 = vmatpush.bf16.msra.mxu0 %v1982
    %2038 = vmatmul.bf16.gmra.mxu0 %v1828
    %v2039 = vpop.f32.mrf.mxu0
    %v2040 = vadd.f32 %v1884, %v2039
    %v2041 = vpop.f32.mrf.mxu0
    %v2042 = vadd.f32 %v1884, %v2041
    %2043 = vmatmul.bf16.gmra.mxu0 %v1831
    %v2044 = vpop.f32.mrf.mxu0
    %v2045 = vadd.f32 %v1884, %v2044
    %v2046 = vpop.f32.mrf.mxu0
    %2047 = vdwg.mxu0
    %2048 = vmatpush.bf16.msra.mxu0 %v1997
    %2049 = vmatpush.bf16.msra.mxu0 %v1996
    %2050 = vmatpush.bf16.msra.mxu0 %v1995
    %2051 = vmatpush.bf16.msra.mxu0 %v1994
    %2052 = vmatpush.bf16.msra.mxu0 %v1993
    %2053 = vmatpush.bf16.msra.mxu0 %v1992
    %2054 = vmatpush.bf16.msra.mxu0 %v1991
    %2055 = vmatpush.bf16.msra.mxu0 %v1990
    %2056 = vmatmul.bf16.gmra.mxu0 %v1829
    %v2057 = vpop.f32.mrf.mxu0
    %v2058 = vadd.f32 %v2040, %v2057
    %v2059 = vpop.f32.mrf.mxu0
    %v2060 = vadd.f32 %v2042, %v2059
    %2061 = vmatmul.bf16.gmra.mxu0 %v1832
    %v2062 = vpop.f32.mrf.mxu0
    %v2063 = vadd.f32 %v2045, %v2062
    %v2064 = vpop.f32.mrf.mxu0
    %2065 = vdwg.mxu0
    %2066 = vmatpush.bf16.msra.mxu0 %v2005
    %2067 = vmatpush.bf16.msra.mxu0 %v2004
    %2068 = vmatpush.bf16.msra.mxu0 %v2003
    %2069 = vmatpush.bf16.msra.mxu0 %v2002
    %2070 = vmatpush.bf16.msra.mxu0 %v2001
    %2071 = vmatpush.bf16.msra.mxu0 %v2000
    %2072 = vmatpush.bf16.msra.mxu0 %v1999
    %2073 = vmatpush.bf16.msra.mxu0 %v1998
    %2074 = vmatmul.bf16.gmra.mxu0 %v1830
    %v2075 = vpop.f32.mrf.mxu0
    %v2076 = vadd.f32 %v2058, %v2075
    %v2077 = vpop.f32.mrf.mxu0
    %v2078 = vadd.f32 %v2060, %v2077
    %2079 = vmatmul.bf16.gmra.mxu0 %v1833
    %v2080 = vpop.f32.mrf.mxu0
    %v2081 = vadd.f32 %v2063, %v2080
    %v2082 = vpop.f32.mrf.mxu0
    %2083 = vdwg.mxu0
    %v2084 = vmax.f32 %v2076, 0.0
    %v2085 = vmax.f32 %v2078, 0.0
    %v2086 = vmax.f32 %v2081, 0.0
    %v2087 = vpack.c.bf16 %v2085, %v2084
    %v2088 = vpack.c.bf16 %v2086, %v2086
    %v2089 = vld [vmem:[#allocation12] sm:$0xf]
    %vm2090 = vcmask 195584
    %v2092 = vsel %vm2090, %v2089, 0
    %v2095 = vsel %vm1734, %v2088, 0
    %2097 = vmatpush.bf16.msra.mxu0 0
    %2098 = vmatpush.bf16.msra.mxu0 0
    %2099 = vmatpush.bf16.msra.mxu0 0
    %2100 = vmatpush.bf16.msra.mxu0 0
    %2101 = vmatpush.bf16.msra.mxu0 0
    %2102 = vmatpush.bf16.msra.mxu0 0
    %2103 = vmatpush.bf16.msra.mxu0 %v2095
    %2104 = vmatpush.bf16.msra.mxu0 %v2087
    %2105 = vmatmul.bf16.gmra.mxu0 %v2092
    %v2106 = vpop.f32.mrf.mxu0
    %v2107 = vadd.f32 0.0, %v2106
    %v2108 = vpop.f32.mrf.mxu0
    %2109 = vdwg.mxu0
    %s2110 = scalar_lea.vmem [#allocation12], 4
    %v2111 = vld [vmem:[%s2110] sm:$0xf]
    %v2113 = vsel %vm2090, %v2111, 0
    %2115 = vmatpush.bf16.msra.mxu0 0
    %2116 = vmatpush.bf16.msra.mxu0 0
    %2117 = vmatpush.bf16.msra.mxu0 0
    %2118 = vmatpush.bf16.msra.mxu0 0
    %2119 = vmatpush.bf16.msra.mxu0 0
    %2120 = vmatpush.bf16.msra.mxu0 0
    %2121 = vmatpush.bf16.msra.mxu0 %v2095
    %2122 = vmatpush.bf16.msra.mxu0 %v2087
    %2123 = vmatmul.bf16.gmra.mxu0 %v2113
    %v2124 = vpop.f32.mrf.mxu0
    %v2125 = vadd.f32 0.0, %v2124
    %v2126 = vpop.f32.mrf.mxu0
    %2127 = vdwg.mxu0
    %s2128 = scalar_lea.vmem [#allocation12], 8
    %v2129 = vld [vmem:[%s2128] sm:$0xf]
    %v2131 = vsel %vm2090, %v2129, 0
    %2133 = vmatpush.bf16.msra.mxu0 0
    %2134 = vmatpush.bf16.msra.mxu0 0
    %2135 = vmatpush.bf16.msra.mxu0 0
    %2136 = vmatpush.bf16.msra.mxu0 0
    %2137 = vmatpush.bf16.msra.mxu0 0
    %2138 = vmatpush.bf16.msra.mxu0 0
    %2139 = vmatpush.bf16.msra.mxu0 %v2095
    %2140 = vmatpush.bf16.msra.mxu0 %v2087
    %2141 = vmatmul.bf16.gmra.mxu0 %v2131
    %v2142 = vpop.f32.mrf.mxu0
    %v2143 = vadd.f32 0.0, %v2142
    %v2144 = vpop.f32.mrf.mxu0
    %2145 = vdwg.mxu0
    %v2146 = vpack.c.bf16 %v2107, %v2107
    %v2147 = vpack.c.bf16 %v2125, %v2125
    %v2148 = vpack.c.bf16 %v2143, %v2143
    %v2149 = vld [vmem:[%s11] sm:$0xf]
    %v2150 = vld [vmem:[%s11 + $0x4] sm:$0xf]
    %v2151 = vld [vmem:[%s11 + $0x8] sm:$0xf]
    %v2152 = vld [vmem:[%s11 + $0xc] sm:$0xf]
    %v2153 = vld [vmem:[%s11 + $0x10] sm:$0xf]
    %v2154 = vld [vmem:[%s11 + $0x14] sm:$0xf]
    %v2155 = vld [vmem:[%s11 + $0x18] sm:$0xf]
    %v2156 = vld [vmem:[%s11 + $0x1c] sm:$0xf]
    %v2157 = vld [vmem:[%s11 + $0x20] sm:$0xf]
    %v2158 = vld [vmem:[%s11 + $0x24] sm:$0xf]
    %v2159 = vld [vmem:[%s11 + $0x28] sm:$0xf]
    %v2160 = vld [vmem:[%s11 + $0x2c] sm:$0xf]
    %v2161 = vld [vmem:[%s11 + $0x30] sm:$0xf]
    %v2162 = vld [vmem:[%s11 + $0x34] sm:$0xf]
    %v2163 = vld [vmem:[%s11 + $0x38] sm:$0xf]
    %v2164 = vld [vmem:[%s11 + $0x3c] sm:$0xf]
    %v2165 = vld [vmem:[%s11 + $0x40] sm:$0xf]
    %v2166 = vld [vmem:[%s11 + $0x44] sm:$0xf]
    %v2167 = vld [vmem:[%s11 + $0x48] sm:$0xf]
    %v2168 = vld [vmem:[%s11 + $0x4c] sm:$0xf]
    %v2169 = vld [vmem:[%s11 + $0x50] sm:$0xf]
    %v2170 = vld [vmem:[%s11 + $0x54] sm:$0xf]
    %v2171 = vld [vmem:[%s11 + $0x58] sm:$0xf]
    %v2172 = vld [vmem:[%s11 + $0x5c] sm:$0xf]
    %v2173 = vld [vmem:[%s11 + $0x60] sm:$0xf]
    %v2174 = vld [vmem:[%s11 + $0x64] sm:$0xf]
    %v2175 = vld [vmem:[%s11 + $0x68] sm:$0xf]
    %v2176 = vld [vmem:[%s11 + $0x6c] sm:$0xf]
    %v2177 = vld [vmem:[%s11 + $0x70] sm:$0xf]
    %v2178 = vld [vmem:[%s11 + $0x74] sm:$0xf]
    %v2179 = vld [vmem:[%s11 + $0x78] sm:$0xf]
    %v2180 = vld [vmem:[%s11 + $0x7c] sm:$0xf]
    %v2181 = vld [vmem:[%s11 + $0x80] sm:$0xf]
    %v2182 = vld [vmem:[%s11 + $0x84] sm:$0xf]
    %v2183 = vld [vmem:[%s11 + $0x88] sm:$0xf]
    %v2184 = vld [vmem:[%s11 + $0x8c] sm:$0xf]
    %v2185 = vld [vmem:[%s11 + $0x90] sm:$0xf]
    %v2186 = vld [vmem:[%s11 + $0x94] sm:$0xf]
    %v2187 = vld [vmem:[%s11 + $0x98] sm:$0xf]
    %v2188 = vld [vmem:[%s11 + $0x9c] sm:$0xf]
    %v2189 = vld [vmem:[%s11 + $0xa0] sm:$0xf]
    %v2190 = vld [vmem:[%s11 + $0xa4] sm:$0xf]
    %v2191 = vld [vmem:[%s11 + $0xa8] sm:$0xf]
    %v2192 = vld [vmem:[%s11 + $0xac] sm:$0xf]
    %v2193 = vld [vmem:[%s11 + $0xb0] sm:$0xf]
    %v2194 = vld [vmem:[%s11 + $0xb4] sm:$0xf]
    %v2195 = vld [vmem:[%s11 + $0xb8] sm:$0xf]
    %v2196 = vld [vmem:[%s11 + $0xbc] sm:$0xf]
    %v2197 = vld [vmem:[%s12] sm:$0x1]
    %v2199 = vperm.slane %v2197, 0
    %v2249 = vunpack.c.l.b16 %v2149
    %v2250 = vunpack.c.l.b16 %v2150
    %v2251 = vunpack.c.l.b16 %v2151
    %v2252 = vunpack.c.l.b16 %v2152
    %v2253 = vunpack.c.l.b16 %v2153
    %v2254 = vunpack.c.l.b16 %v2154
    %v2255 = vunpack.c.l.b16 %v2155
    %v2256 = vunpack.c.l.b16 %v2156
    %v2257 = vunpack.c.l.b16 %v2157
    %v2258 = vunpack.c.l.b16 %v2158
    %v2259 = vunpack.c.l.b16 %v2159
    %v2260 = vunpack.c.l.b16 %v2160
    %v2261 = vunpack.c.l.b16 %v2161
    %v2262 = vunpack.c.l.b16 %v2162
    %v2263 = vunpack.c.l.b16 %v2163
    %v2264 = vunpack.c.l.b16 %v2164
    %v2265 = vunpack.c.l.b16 %v2165
    %v2266 = vunpack.c.l.b16 %v2166
    %v2267 = vunpack.c.l.b16 %v2167
    %v2268 = vunpack.c.l.b16 %v2168
    %v2269 = vunpack.c.l.b16 %v2169
    %v2270 = vunpack.c.l.b16 %v2170
    %v2271 = vunpack.c.l.b16 %v2171
    %v2272 = vunpack.c.l.b16 %v2172
    %v2273 = vunpack.c.l.b16 %v2173
    %v2274 = vunpack.c.l.b16 %v2174
    %v2275 = vunpack.c.l.b16 %v2175
    %v2276 = vunpack.c.l.b16 %v2176
    %v2277 = vunpack.c.l.b16 %v2177
    %v2278 = vunpack.c.l.b16 %v2178
    %v2279 = vunpack.c.l.b16 %v2179
    %v2280 = vunpack.c.l.b16 %v2180
    %v2281 = vunpack.c.l.b16 %v2181
    %v2282 = vunpack.c.l.b16 %v2182
    %v2283 = vunpack.c.l.b16 %v2183
    %v2284 = vunpack.c.l.b16 %v2184
    %v2285 = vunpack.c.l.b16 %v2185
    %v2286 = vunpack.c.l.b16 %v2186
    %v2287 = vunpack.c.l.b16 %v2187
    %v2288 = vunpack.c.l.b16 %v2188
    %v2289 = vunpack.c.l.b16 %v2189
    %v2290 = vunpack.c.l.b16 %v2190
    %v2291 = vunpack.c.l.b16 %v2191
    %v2292 = vunpack.c.l.b16 %v2192
    %v2293 = vunpack.c.l.b16 %v2193
    %v2294 = vunpack.c.l.b16 %v2194
    %v2295 = vunpack.c.l.b16 %v2195
    %v2296 = vunpack.c.l.b16 %v2196
    %v2297 = vpack.c.b16 %v2250, %v2249
    %v2298 = vpack.c.b16 %v2252, %v2251
    %v2299 = vpack.c.b16 %v2254, %v2253
    %v2300 = vpack.c.b16 %v2256, %v2255
    %v2301 = vpack.c.b16 %v2258, %v2257
    %v2302 = vpack.c.b16 %v2260, %v2259
    %v2303 = vpack.c.b16 %v2262, %v2261
    %v2304 = vpack.c.b16 %v2264, %v2263
    %v2305 = vpack.c.b16 %v2266, %v2265
    %v2306 = vpack.c.b16 %v2268, %v2267
    %v2307 = vpack.c.b16 %v2270, %v2269
    %v2308 = vpack.c.b16 %v2272, %v2271
    %v2309 = vpack.c.b16 %v2274, %v2273
    %v2310 = vpack.c.b16 %v2276, %v2275
    %v2311 = vpack.c.b16 %v2278, %v2277
    %v2312 = vpack.c.b16 %v2280, %v2279
    %v2313 = vpack.c.b16 %v2282, %v2281
    %v2314 = vpack.c.b16 %v2284, %v2283
    %v2315 = vpack.c.b16 %v2286, %v2285
    %v2316 = vpack.c.b16 %v2288, %v2287
    %v2317 = vpack.c.b16 %v2290, %v2289
    %v2318 = vpack.c.b16 %v2292, %v2291
    %v2319 = vpack.c.b16 %v2294, %v2293
    %v2320 = vpack.c.b16 %v2296, %v2295
    %2345 = vmatpush.bf16.msra.mxu0 %v2304
    %2346 = vmatpush.bf16.msra.mxu0 %v2303
    %2347 = vmatpush.bf16.msra.mxu0 %v2302
    %2348 = vmatpush.bf16.msra.mxu0 %v2301
    %2349 = vmatpush.bf16.msra.mxu0 %v2300
    %2350 = vmatpush.bf16.msra.mxu0 %v2299
    %2351 = vmatpush.bf16.msra.mxu0 %v2298
    %2352 = vmatpush.bf16.msra.mxu0 %v2297
    %2353 = vmatmul.bf16.gmra.mxu0 %v2146
    %v2354 = vpop.f32.mrf.mxu0
    %v2355 = vadd.f32 %v2199, %v2354
    %v2356 = vpop.f32.mrf.mxu0
    %2357 = vdwg.mxu0
    %2358 = vmatpush.bf16.msra.mxu0 %v2312
    %2359 = vmatpush.bf16.msra.mxu0 %v2311
    %2360 = vmatpush.bf16.msra.mxu0 %v2310
    %2361 = vmatpush.bf16.msra.mxu0 %v2309
    %2362 = vmatpush.bf16.msra.mxu0 %v2308
    %2363 = vmatpush.bf16.msra.mxu0 %v2307
    %2364 = vmatpush.bf16.msra.mxu0 %v2306
    %2365 = vmatpush.bf16.msra.mxu0 %v2305
    %2366 = vmatmul.bf16.gmra.mxu0 %v2147
    %v2367 = vpop.f32.mrf.mxu0
    %v2368 = vadd.f32 %v2355, %v2367
    %v2369 = vpop.f32.mrf.mxu0
    %2370 = vdwg.mxu0
    %2371 = vmatpush.bf16.msra.mxu0 %v2320
    %2372 = vmatpush.bf16.msra.mxu0 %v2319
    %2373 = vmatpush.bf16.msra.mxu0 %v2318
    %2374 = vmatpush.bf16.msra.mxu0 %v2317
    %2375 = vmatpush.bf16.msra.mxu0 %v2316
    %2376 = vmatpush.bf16.msra.mxu0 %v2315
    %2377 = vmatpush.bf16.msra.mxu0 %v2314
    %2378 = vmatpush.bf16.msra.mxu0 %v2313
    %2379 = vmatmul.bf16.gmra.mxu0 %v2148
    %v2380 = vpop.f32.mrf.mxu0
    %v2381 = vadd.f32 %v2368, %v2380
    %v2382 = vpop.f32.mrf.mxu0
    %2383 = vdwg.mxu0
    %v2384 = vmax.f32 %v2381, 0.0
    %v2385 = vpack.c.bf16 %v2384, %v2384
    %v2386 = vld [vmem:[#allocation13] sm:$0xf]
    %v2387 = vld [vmem:[#allocation13 + $0x4] sm:$0xf]
    %v2388 = vld [vmem:[#allocation13 + $0x8] sm:$0xf]
    %v2389 = vld [vmem:[#allocation13 + $0xc] sm:$0xf]
    %v2390 = vld [vmem:[%s14] sm:$0x1]
    %v2392 = vperm.slane %v2390, 0
    %v2398 = vunpack.c.l.b16 %v2386
    %v2399 = vunpack.c.l.b16 %v2387
    %v2400 = vunpack.c.l.b16 %v2388
    %v2401 = vunpack.c.l.b16 %v2389
    %v2402 = vpack.c.b16 %v2399, %v2398
    %v2403 = vpack.c.b16 %v2401, %v2400
    %vm2406 = vcmask 261120
    %v2408 = vsel %vm2406, %v2385, 0
    %2410 = vmatpush.bf16.msra.mxu0 0
    %2411 = vmatpush.bf16.msra.mxu0 0
    %2412 = vmatpush.bf16.msra.mxu0 0
    %2413 = vmatpush.bf16.msra.mxu0 0
    %2414 = vmatpush.bf16.msra.mxu0 0
    %2415 = vmatpush.bf16.msra.mxu0 0
    %2416 = vmatpush.bf16.msra.mxu0 %v2403
    %2417 = vmatpush.bf16.msra.mxu0 %v2402
    %2418 = vmatmul.bf16.gmra.mxu0 %v2408
    %v2419 = vpop.f32.mrf.mxu0
    %v2420 = vadd.f32 %v2392, %v2419
    %v2421 = vpop.f32.mrf.mxu0
    %2422 = vdwg.mxu0
    %2423 = vst [vmem:[%s15] sm:$0xff] %v2420
    // Predicated region
    $region94: #{encoder_conv_forward.1} parent=1 // pred_check
      _
    $region95: #{encoder_conv_forward.1} parent=1 // pred_check_branch
      %2425 = sbr.rel (0) target = $region97
    $region96: #{encoder_conv_forward.1} parent=1 // pred_region
      _
    $region97: #{encoder_conv_forward.1} parent=1 // pred_fallthru
      _
    // Predicated region
    $region98: #{encoder_conv_forward.1} parent=1 // pred_check
      _
    $region99: #{encoder_conv_forward.1} parent=1 // pred_check_branch
      %2427 = sbr.rel (0) target = $region101
    $region100: #{encoder_conv_forward.1} parent=1 // pred_region
      _
    $region101: #{encoder_conv_forward.1} parent=1 // pred_fallthru
      _
    %2428 = vsyncpa [#allocation3], 1
    %2429 = vsyncpa [#allocation5], 1
    %2430 = vsyncpa [#allocation8], 1
    %2431 = vsyncpa [#allocation11], 1
    %2432 = vsyncpa [#allocation14], 1

</llo_original>
